<compile_context>
chip_gen: v5e
topology: v5e:2x2
jax: 0.10.0
libtpu: 0.0.40
codegen_flags: <defaults>
</compile_context>

<pallas_src>
import functools

import jax
import jax.numpy as jnp
from jax.experimental import pallas as pl
from jax.experimental.pallas import tpu as pltpu


def _round_up(x, m):
    return (x + m - 1) // m * m


def _choose_tiles(num_nodes, block_m, block_k):
    """Pick (tm, tk) with tk a multiple of tm so padding = round_up(N, tk)."""
    assert block_m % 128 == 0 and block_k % 128 == 0
    n128 = _round_up(max(num_nodes, 1), 128)
    tm = max(128, min(block_m, n128))
    tk = max(tm, min(block_k, n128))
    tk = _round_up(tk, tm)
    return tm, tk


# ---------------------------------------------------------------------------
# Layer 1: h1 = relu( (A @ XW1) * rdeg + b1 + X @ W1r )      (bf16, lane-dense width)
#   A       : unnormalized 0/1 adjacency (bf16), streamed (tm, tk) tiles
#   XW1     : precomputed X @ W1l (bf16), streamed (tk, hid1_p) tiles
#   rdeg    : per-row 1/deg (f32), applied in the epilogue
# ---------------------------------------------------------------------------
def sage_layer1_kernel(a_ref, xw_ref, xi_ref, rdeg_ref, w1r_ref, b1_ref,
                       h1_ref, acc_ref):
    k = pl.program_id(1)

    @pl.when(k == 0)
    def _():
        acc_ref[...] = jnp.zeros_like(acc_ref)

    acc_ref[...] += jnp.dot(a_ref[...], xw_ref[...],
                            preferred_element_type=jnp.float32)

    @pl.when(k == pl.num_programs(1) - 1)
    def _():
        root = jnp.dot(xi_ref[...], w1r_ref[...],
                       preferred_element_type=jnp.float32)
        h1 = jnp.maximum(acc_ref[...] * rdeg_ref[...] + b1_ref[...] + root, 0.0)
        h1_ref[...] = h1.astype(h1_ref.dtype)


# ---------------------------------------------------------------------------
# Layer 2 + fc: h2 = relu( (A @ HW2) * rdeg + b2 + H1 @ W2r )
#               slab = h2 @ [I | Wfc | 0] + [0 | bfc | 0]     (lane-dense pad_w store)
# ---------------------------------------------------------------------------
def sage_layer2_kernel(a_ref, hw_ref, hi_ref, rdeg_ref, w2r_ref, b2_ref,
                       wcat_ref, bcat_ref, o_ref, acc_ref):
    k = pl.program_id(1)

    @pl.when(k == 0)
    def _():
        acc_ref[...] = jnp.zeros_like(acc_ref)

    acc_ref[...] += jnp.dot(a_ref[...], hw_ref[...],
                            preferred_element_type=jnp.float32)

    @pl.when(k == pl.num_programs(1) - 1)
    def _():
        root = jnp.dot(hi_ref[...], w2r_ref[...],
                       preferred_element_type=jnp.float32)
        h2 = jnp.maximum(acc_ref[...] * rdeg_ref[...] + b2_ref[...] + root, 0.0)
        # One lane-dense epilogue matmul writes [embedding | fc(embedding) | 0-pad]
        # as a single unmasked 128-lane-multiple store.
        o_ref[...] = (jnp.dot(h2, wcat_ref[...],
                              preferred_element_type=jnp.float32)
                      + bcat_ref[...])


@functools.partial(jax.jit, static_argnames=("num_nodes", "block_m", "block_k"))
def sage_extract(x, edge_index, params, *, num_nodes, block_m=512, block_k=2048):
    """x: (N, in_dim) float32, edge_index: (2, E) int32 with row0=src, row1=dst."""
    (w1l, b1l, w1r, w2l, b2l, w2r, wfc, bfc) = params
    in_dim = x.shape[1]
    hid1 = w1l.shape[1]
    hid2 = w2l.shape[1]
    out_dim = wfc.shape[1]

    hid1_p = _round_up(hid1, 128)            # lane-dense layer-1 activation width
    pad_w = _round_up(hid2 + out_dim, 128)   # lane-dense fused layer-2+fc output width

    tm, tk = _choose_tiles(num_nodes, block_m, block_k)
    n_pad = _round_up(num_nodes, tk)
    grid = (n_pad // tm, n_pad // tk)

    src = edge_index[0]
    dst = edge_index[1]

    # O(E) degree + f32 reciprocal (consumed in the kernel epilogues — no bf16 1/deg error).
    deg = jnp.zeros((n_pad,), jnp.float32).at[dst].add(1.0)
    rdeg = (1.0 / jnp.maximum(deg, 1.0)).reshape(n_pad, 1)

    # Unnormalized adjacency built directly in bf16 (edge counts are small ints — exact).
    # TODO(synk): replace the dense O(N^2) adjacency with a CSR / scalar-prefetch gather
    #             aggregation (PrefetchScalarGridSpec row pointers) for large graphs.
    a_cnt = jnp.zeros((n_pad, n_pad), jnp.bfloat16).at[dst, src].add(jnp.bfloat16(1.0))

    # Padded node features (f32 for the precompute, bf16 for the in-kernel root path).
    x_f32 = jnp.zeros((n_pad, in_dim), jnp.float32).at[:num_nodes].set(x)
    x_bf16 = x_f32.astype(jnp.bfloat16)

    # Layer-1 weights, column-padded to hid1_p so the layer-1 output slab is lane-dense.
    w1l_p = jnp.zeros((in_dim, hid1_p), jnp.float32).at[:, :hid1].set(w1l)
    w1r_p = jnp.zeros((in_dim, hid1_p), jnp.bfloat16).at[:, :hid1].set(
        w1r.astype(jnp.bfloat16))
    b1_p = jnp.zeros((1, hid1_p), jnp.float32).at[:, :hid1].set(b1l)

    # Precompute aggregation-path product once; stream bf16 tiles of it.
    xw1 = jnp.dot(x_f32, w1l_p).astype(jnp.bfloat16)          # (n_pad, hid1_p)

    cparams = pltpu.CompilerParams(
        dimension_semantics=("parallel", "arbitrary"),
        vmem_limit_bytes=48 * 1024 * 1024)

    # -------------------- layer 1 --------------------
    h1 = pl.pallas_call(
        sage_layer1_kernel,
        out_shape=jax.ShapeDtypeStruct((n_pad, hid1_p), jnp.bfloat16),
        grid_spec=pltpu.PrefetchScalarGridSpec(
            num_scalar_prefetch=0,
            grid=grid,
            in_specs=[
                pl.BlockSpec((tm, tk), lambda i, k: (i, k)),          # A tile
                pl.BlockSpec((tk, hid1_p), lambda i, k: (k, 0)),      # XW1 (aggregation)
                pl.BlockSpec((tm, in_dim), lambda i, k: (i, 0)),      # X (root path)
                pl.BlockSpec((tm, 1), lambda i, k: (i, 0)),           # 1/deg
                pl.BlockSpec((in_dim, hid1_p), lambda i, k: (0, 0)),  # W1_r (bf16)
                pl.BlockSpec((1, hid1_p), lambda i, k: (0, 0)),       # b1
            ],
            out_specs=pl.BlockSpec((tm, hid1_p), lambda i, k: (i, 0)),
            scratch_shapes=[pltpu.VMEM((tm, hid1_p), jnp.float32)],
        ),
        compiler_params=cparams,
    )(a_cnt, xw1, x_bf16, rdeg, w1r_p, b1_p)

    # -------------------- layer 2 + fc --------------------
    # W2 rows zero-padded to hid1_p to match the lane-dense h1 slab.
    w2l_p = jnp.zeros((hid1_p, hid2), jnp.bfloat16).at[:hid1].set(
        w2l.astype(jnp.bfloat16))
    w2r_p = jnp.zeros((hid1_p, hid2), jnp.bfloat16).at[:hid1].set(
        w2r.astype(jnp.bfloat16))
    hw2 = jnp.dot(h1, w2l_p, preferred_element_type=jnp.float32).astype(
        jnp.bfloat16)                                          # (n_pad, hid2)

    # Fused fc operands: [I | Wfc | 0] and [0 | bfc | 0], pad_w-wide (>= hid2 + out_dim).
    wcat = jnp.zeros((hid2, pad_w), jnp.float32)
    wcat = wcat.at[:, :hid2].set(jnp.eye(hid2, dtype=jnp.float32))
    wcat = wcat.at[:, hid2:hid2 + out_dim].set(wfc)
    bcat = jnp.zeros((1, pad_w), jnp.float32).at[:, hid2:hid2 + out_dim].set(bfc)

    slab = pl.pallas_call(
        sage_layer2_kernel,
        out_shape=jax.ShapeDtypeStruct((n_pad, pad_w), jnp.float32),
        grid_spec=pltpu.PrefetchScalarGridSpec(
            num_scalar_prefetch=0,
            grid=grid,
            in_specs=[
                pl.BlockSpec((tm, tk), lambda i, k: (i, k)),          # A tile
                pl.BlockSpec((tk, hid2), lambda i, k: (k, 0)),        # HW2 (aggregation)
                pl.BlockSpec((tm, hid1_p), lambda i, k: (i, 0)),      # H1 (root path)
                pl.BlockSpec((tm, 1), lambda i, k: (i, 0)),           # 1/deg
                pl.BlockSpec((hid1_p, hid2), lambda i, k: (0, 0)),    # W2_r (bf16)
                pl.BlockSpec((1, hid2), lambda i, k: (0, 0)),         # b2
                pl.BlockSpec((hid2, pad_w), lambda i, k: (0, 0)),     # [I | Wfc | 0]
                pl.BlockSpec((1, pad_w), lambda i, k: (0, 0)),        # [0 | bfc | 0]
            ],
            out_specs=pl.BlockSpec((tm, pad_w), lambda i, k: (i, 0)),
            scratch_shapes=[pltpu.VMEM((tm, hid2), jnp.float32)],
        ),
        compiler_params=cparams,
    )(a_cnt, hw2, h1, rdeg, w2r_p, b2l, wcat, bcat)

    emb = slab[:num_nodes, :hid2]
    out = slab[:num_nodes, hid2:hid2 + out_dim]
    return emb, out


def reference(x, edge_index, params, num_nodes):
    """Pure-JAX f32 reference for a correctness sanity check."""
    src, dst = edge_index[0], edge_index[1]
    adj = jnp.zeros((num_nodes, num_nodes), jnp.float32).at[dst, src].add(1.0)
    deg = jnp.sum(adj, axis=1, keepdims=True)
    a_mean = adj / jnp.maximum(deg, 1.0)
    (w1l, b1l, w1r, w2l, b2l, w2r, wfc, bfc) = params
    h = jnp.maximum(a_mean @ x @ w1l + b1l + x @ w1r, 0.0)
    h = jnp.maximum(a_mean @ h @ w2l + b2l + h @ w2r, 0.0)
    return h, h @ wfc + bfc


if __name__ == "__main__":
    # Small shapes consistent with the module: in_dim=8, hidden=[64, 32], out_dim=8, N=16 nodes.
    num_nodes, in_dim, out_dim = 16, 8, 8
    hidden = [64, 32]
    num_edges = 48

    key = jax.random.PRNGKey(0)
    keys = jax.random.split(key, 12)

    x = jax.random.normal(keys[0], (num_nodes, in_dim), dtype=jnp.float32)
    src = jax.random.randint(keys[1], (num_edges,), 0, num_nodes, dtype=jnp.int32)
    dst = jax.random.randint(keys[2], (num_edges,), 0, num_nodes, dtype=jnp.int32)
    edge_index = jnp.stack([src, dst], axis=0)

    def init_w(k, fan_in, fan_out):
        scale = 1.0 / jnp.sqrt(jnp.float32(fan_in))
        return jax.random.uniform(k, (fan_in, fan_out), jnp.float32, -scale, scale)

    # Deterministic synthetic parameters (stored as (in, out), i.e. already transposed vs torch).
    params = (
        init_w(keys[3], in_dim, hidden[0]),                                   # SAGE1 lin_l weight
        jax.random.uniform(keys[4], (1, hidden[0]), jnp.float32, -0.1, 0.1),  # SAGE1 lin_l bias
        init_w(keys[5], in_dim, hidden[0]),                                   # SAGE1 lin_r weight (no bias)
        init_w(keys[6], hidden[0], hidden[1]),                                # SAGE2 lin_l weight
        jax.random.uniform(keys[7], (1, hidden[1]), jnp.float32, -0.1, 0.1),  # SAGE2 lin_l bias
        init_w(keys[8], hidden[0], hidden[1]),                                # SAGE2 lin_r weight (no bias)
        init_w(keys[9], hidden[1], out_dim),                                  # fc weight
        jax.random.uniform(keys[10], (1, out_dim), jnp.float32, -0.1, 0.1),   # fc bias
    )

    emb, out = sage_extract(x, edge_index, params, num_nodes=num_nodes)
    jax.block_until_ready((emb, out))

    emb_ref, out_ref_ = reference(x, edge_index, params, num_nodes)
    assert emb.shape == (num_nodes, hidden[-1]) and out.shape == (num_nodes, out_dim)
    # bf16 adjacency/activations with f32 accumulation -> relaxed tolerance vs f32 reference.
    assert jnp.allclose(emb, emb_ref, atol=3e-2, rtol=3e-2)
    assert jnp.allclose(out, out_ref_, atol=3e-2, rtol=3e-2)

    print("KERNEL_OK")
</pallas_src>

<mosaic_0001>
module attributes {stable_mosaic.version = 11 : i64} {
  func.func @sage_layer1_kernel(%arg0: i32, %arg1: i32, %arg2: memref<128x128xbf16, #tpu.memory_space<vmem>>, %arg3: memref<128x128xbf16, #tpu.memory_space<vmem>>, %arg4: memref<128x8xbf16, #tpu.memory_space<vmem>>, %arg5: memref<128x1xf32, #tpu.memory_space<vmem>>, %arg6: memref<8x128xbf16, #tpu.memory_space<vmem>>, %arg7: memref<1x128xf32, #tpu.memory_space<vmem>>, %arg8: memref<128x128xbf16, #tpu.memory_space<vmem>>, %arg9: memref<128x128xf32, #tpu.memory_space<vmem>>) attributes {dimension_semantics = [#tpu.dimension_semantics<parallel>, #tpu.dimension_semantics<arbitrary>], iteration_bounds = array<i64: 1, 1>, scalar_prefetch = 0 : i64, scratch_operands = 1 : i64, tpu.core_type = #tpu.core_type<tc>, window_params = [{transform_indices = @transform_0, window_bounds = array<i64: 128, 128>}, {transform_indices = @transform_1, window_bounds = array<i64: 128, 128>}, {transform_indices = @transform_2, window_bounds = array<i64: 128, 8>}, {transform_indices = @transform_3, window_bounds = array<i64: 128, 1>}, {pipeline_mode = #tpu.pipeline_mode<synchronous>, transform_indices = @transform_4, window_bounds = array<i64: 8, 128>}, {pipeline_mode = #tpu.pipeline_mode<synchronous>, transform_indices = @transform_5, window_bounds = array<i64: 1, 128>}, {transform_indices = @transform_6, window_bounds = array<i64: 128, 128>}]} {
    %c0_i32 = arith.constant 0 : i32
    %0 = arith.cmpi eq, %arg1, %c0_i32 : i32
    %1 = arith.extui %0 : i1 to i32
    %c0_i32_0 = arith.constant 0 : i32
    %2 = arith.cmpi ne, %1, %c0_i32_0 : i32
    scf.if %2 {
      %cst_10 = arith.constant 0.000000e+00 : f32
      %12 = vector.broadcast %cst_10 : f32 to vector<128x128xf32>
      %c0_11 = arith.constant 0 : index
      %c0_12 = arith.constant 0 : index
      %13 = vector.load %arg9[%c0_11, %c0_12] : memref<128x128xf32, #tpu.memory_space<vmem>>, vector<128x128xf32>
      tpu.vector_store %arg9[%c0_11, %c0_12], %12 {strides = array<i32>} : memref<128x128xf32, #tpu.memory_space<vmem>>, vector<128x128xf32>,
    } else {
    }
    %c0 = arith.constant 0 : index
    %c0_1 = arith.constant 0 : index
    %3 = vector.load %arg9[%c0, %c0_1] : memref<128x128xf32, #tpu.memory_space<vmem>>, vector<128x128xf32>
    %c0_2 = arith.constant 0 : index
    %c0_3 = arith.constant 0 : index
    %4 = vector.load %arg2[%c0_2, %c0_3] : memref<128x128xbf16, #tpu.memory_space<vmem>>, vector<128x128xbf16>
    %c0_4 = arith.constant 0 : index
    %c0_5 = arith.constant 0 : index
    %5 = vector.load %arg3[%c0_4, %c0_5] : memref<128x128xbf16, #tpu.memory_space<vmem>>, vector<128x128xbf16>
    %cst = arith.constant dense<0.000000e+00> : vector<128x128xf32>
    %6 = tpu.matmul %4, %5, %cst {dimension_numbers = #tpu.dot_dimension_numbers<[1], [0], [0], [1], [0, 0, 1, 1], [], []>} : vector<128x128xbf16>, vector<128x128xbf16>, vector<128x128xf32> -> vector<128x128xf32>
    %7 = arith.addf %3, %6 : vector<128x128xf32>
    %c0_6 = arith.constant 0 : index
    %c0_7 = arith.constant 0 : index
    %8 = vector.load %arg9[%c0_6, %c0_7] : memref<128x128xf32, #tpu.memory_space<vmem>>, vector<128x128xf32>
    tpu.vector_store %arg9[%c0_6, %c0_7], %7 {strides = array<i32>} : memref<128x128xf32, #tpu.memory_space<vmem>>, vector<128x128xf32>,
    %c0_i32_8 = arith.constant 0 : i32
    %9 = arith.cmpi eq, %arg1, %c0_i32_8 : i32
    %10 = arith.extui %9 : i1 to i32
    %c0_i32_9 = arith.constant 0 : i32
    %11 = arith.cmpi ne, %10, %c0_i32_9 : i32
    scf.if %11 {
      %c0_10 = arith.constant 0 : index
      %c0_11 = arith.constant 0 : index
      %12 = vector.load %arg4[%c0_10, %c0_11] : memref<128x8xbf16, #tpu.memory_space<vmem>>, vector<128x8xbf16>
      %c0_12 = arith.constant 0 : index
      %c0_13 = arith.constant 0 : index
      %13 = vector.load %arg6[%c0_12, %c0_13] : memref<8x128xbf16, #tpu.memory_space<vmem>>, vector<8x128xbf16>
      %cst_14 = arith.constant dense<0.000000e+00> : vector<128x128xf32>
      %14 = tpu.matmul %12, %13, %cst_14 {dimension_numbers = #tpu.dot_dimension_numbers<[1], [0], [0], [1], [0, 0, 1, 1], [], []>} : vector<128x8xbf16>, vector<8x128xbf16>, vector<128x128xf32> -> vector<128x128xf32>
      %c0_15 = arith.constant 0 : index
      %c0_16 = arith.constant 0 : index
      %15 = vector.load %arg9[%c0_15, %c0_16] : memref<128x128xf32, #tpu.memory_space<vmem>>, vector<128x128xf32>
      %c0_17 = arith.constant 0 : index
      %c0_18 = arith.constant 0 : index
      %16 = vector.load %arg5[%c0_17, %c0_18] : memref<128x1xf32, #tpu.memory_space<vmem>>, vector<128x1xf32>
      %17 = vector.broadcast %16 : vector<128x1xf32> to vector<128x128xf32>
      %18 = arith.mulf %15, %17 : vector<128x128xf32>
      %c0_19 = arith.constant 0 : index
      %c0_20 = arith.constant 0 : index
      %19 = vector.load %arg7[%c0_19, %c0_20] : memref<1x128xf32, #tpu.memory_space<vmem>>, vector<1x128xf32>
      %20 = vector.broadcast %19 : vector<1x128xf32> to vector<128x128xf32>
      %21 = arith.addf %18, %20 : vector<128x128xf32>
      %22 = arith.addf %21, %14 : vector<128x128xf32>
      %cst_21 = arith.constant 0.000000e+00 : f32
      %23 = vector.broadcast %cst_21 : f32 to vector<128x128xf32>
      %24 = arith.maximumf %22, %23 : vector<128x128xf32>
      %25 = arith.truncf %24 : vector<128x128xf32> to vector<128x128xbf16>
      %c0_22 = arith.constant 0 : index
      %c0_23 = arith.constant 0 : index
      %26 = vector.load %arg8[%c0_22, %c0_23] : memref<128x128xbf16, #tpu.memory_space<vmem>>, vector<128x128xbf16>
      tpu.vector_store %arg8[%c0_22, %c0_23], %25 {strides = array<i32>} : memref<128x128xbf16, #tpu.memory_space<vmem>>, vector<128x128xbf16>,
    } else {
    }
    return
  }
  func.func @transform_0(%arg0: i32, %arg1: i32) -> (i32, i32) {
    %c0_i32 = arith.constant 0 : i32
    return %arg0, %arg1 : i32, i32
  }
  func.func @transform_1(%arg0: i32, %arg1: i32) -> (i32, i32) {
    %c0_i32 = arith.constant 0 : i32
    %c0_i32_0 = arith.constant 0 : i32
    return %arg1, %c0_i32 : i32, i32
  }
  func.func @transform_2(%arg0: i32, %arg1: i32) -> (i32, i32) {
    %c0_i32 = arith.constant 0 : i32
    %c0_i32_0 = arith.constant 0 : i32
    return %arg0, %c0_i32 : i32, i32
  }
  func.func @transform_3(%arg0: i32, %arg1: i32) -> (i32, i32) {
    %c0_i32 = arith.constant 0 : i32
    %c0_i32_0 = arith.constant 0 : i32
    return %arg0, %c0_i32 : i32, i32
  }
  func.func @transform_4(%arg0: i32, %arg1: i32) -> (i32, i32) {
    %c0_i32 = arith.constant 0 : i32
    %c0_i32_0 = arith.constant 0 : i32
    %c0_i32_1 = arith.constant 0 : i32
    return %c0_i32, %c0_i32_0 : i32, i32
  }
  func.func @transform_5(%arg0: i32, %arg1: i32) -> (i32, i32) {
    %c0_i32 = arith.constant 0 : i32
    %c0_i32_0 = arith.constant 0 : i32
    %c0_i32_1 = arith.constant 0 : i32
    return %c0_i32, %c0_i32_0 : i32, i32
  }
  func.func @transform_6(%arg0: i32, %arg1: i32) -> (i32, i32) {
    %c0_i32 = arith.constant 0 : i32
    %c0_i32_0 = arith.constant 0 : i32
    return %arg0, %c0_i32 : i32, i32
  }
}

module attributes {stable_mosaic.version = 11 : i64} {
  func.func @sage_layer2_kernel(%arg0: i32, %arg1: i32, %arg2: memref<128x128xbf16, #tpu.memory_space<vmem>>, %arg3: memref<128x32xbf16, #tpu.memory_space<vmem>>, %arg4: memref<128x128xbf16, #tpu.memory_space<vmem>>, %arg5: memref<128x1xf32, #tpu.memory_space<vmem>>, %arg6: memref<128x32xbf16, #tpu.memory_space<vmem>>, %arg7: memref<1x32xf32, #tpu.memory_space<vmem>>, %arg8: memref<32x128xf32, #tpu.memory_space<vmem>>, %arg9: memref<1x128xf32, #tpu.memory_space<vmem>>, %arg10: memref<128x128xf32, #tpu.memory_space<vmem>>, %arg11: memref<128x32xf32, #tpu.memory_space<vmem>>) attributes {dimension_semantics = [#tpu.dimension_semantics<parallel>, #tpu.dimension_semantics<arbitrary>], iteration_bounds = array<i64: 1, 1>, scalar_prefetch = 0 : i64, scratch_operands = 1 : i64, tpu.core_type = #tpu.core_type<tc>, window_params = [{transform_indices = @transform_0, window_bounds = array<i64: 128, 128>}, {transform_indices = @transform_1, window_bounds = array<i64: 128, 32>}, {transform_indices = @transform_2, window_bounds = array<i64: 128, 128>}, {transform_indices = @transform_3, window_bounds = array<i64: 128, 1>}, {pipeline_mode = #tpu.pipeline_mode<synchronous>, transform_indices = @transform_4, window_bounds = array<i64: 128, 32>}, {pipeline_mode = #tpu.pipeline_mode<synchronous>, transform_indices = @transform_5, window_bounds = array<i64: 1, 32>}, {pipeline_mode = #tpu.pipeline_mode<synchronous>, transform_indices = @transform_6, window_bounds = array<i64: 32, 128>}, {pipeline_mode = #tpu.pipeline_mode<synchronous>, transform_indices = @transform_7, window_bounds = array<i64: 1, 128>}, {transform_indices = @transform_8, window_bounds = array<i64: 128, 128>}]} {
    %c0_i32 = arith.constant 0 : i32
    %0 = arith.cmpi eq, %arg1, %c0_i32 : i32
    %1 = arith.extui %0 : i1 to i32
    %c0_i32_0 = arith.constant 0 : i32
    %2 = arith.cmpi ne, %1, %c0_i32_0 : i32
    scf.if %2 {
      %cst_10 = arith.constant 0.000000e+00 : f32
      %12 = vector.broadcast %cst_10 : f32 to vector<128x32xf32>
      %c0_11 = arith.constant 0 : index
      %c0_12 = arith.constant 0 : index
      %13 = vector.load %arg11[%c0_11, %c0_12] : memref<128x32xf32, #tpu.memory_space<vmem>>, vector<128x32xf32>
      tpu.vector_store %arg11[%c0_11, %c0_12], %12 {strides = array<i32>} : memref<128x32xf32, #tpu.memory_space<vmem>>, vector<128x32xf32>,
    } else {
    }
    %c0 = arith.constant 0 : index
    %c0_1 = arith.constant 0 : index
    %3 = vector.load %arg11[%c0, %c0_1] : memref<128x32xf32, #tpu.memory_space<vmem>>, vector<128x32xf32>
    %c0_2 = arith.constant 0 : index
    %c0_3 = arith.constant 0 : index
    %4 = vector.load %arg2[%c0_2, %c0_3] : memref<128x128xbf16, #tpu.memory_space<vmem>>, vector<128x128xbf16>
    %c0_4 = arith.constant 0 : index
    %c0_5 = arith.constant 0 : index
    %5 = vector.load %arg3[%c0_4, %c0_5] : memref<128x32xbf16, #tpu.memory_space<vmem>>, vector<128x32xbf16>
    %cst = arith.constant dense<0.000000e+00> : vector<128x32xf32>
    %6 = tpu.matmul %4, %5, %cst {dimension_numbers = #tpu.dot_dimension_numbers<[1], [0], [0], [1], [0, 0, 1, 1], [], []>} : vector<128x128xbf16>, vector<128x32xbf16>, vector<128x32xf32> -> vector<128x32xf32>
    %7 = arith.addf %3, %6 : vector<128x32xf32>
    %c0_6 = arith.constant 0 : index
    %c0_7 = arith.constant 0 : index
    %8 = vector.load %arg11[%c0_6, %c0_7] : memref<128x32xf32, #tpu.memory_space<vmem>>, vector<128x32xf32>
    tpu.vector_store %arg11[%c0_6, %c0_7], %7 {strides = array<i32>} : memref<128x32xf32, #tpu.memory_space<vmem>>, vector<128x32xf32>,
    %c0_i32_8 = arith.constant 0 : i32
    %9 = arith.cmpi eq, %arg1, %c0_i32_8 : i32
    %10 = arith.extui %9 : i1 to i32
    %c0_i32_9 = arith.constant 0 : i32
    %11 = arith.cmpi ne, %10, %c0_i32_9 : i32
    scf.if %11 {
      %c0_10 = arith.constant 0 : index
      %c0_11 = arith.constant 0 : index
      %12 = vector.load %arg4[%c0_10, %c0_11] : memref<128x128xbf16, #tpu.memory_space<vmem>>, vector<128x128xbf16>
      %c0_12 = arith.constant 0 : index
      %c0_13 = arith.constant 0 : index
      %13 = vector.load %arg6[%c0_12, %c0_13] : memref<128x32xbf16, #tpu.memory_space<vmem>>, vector<128x32xbf16>
      %cst_14 = arith.constant dense<0.000000e+00> : vector<128x32xf32>
      %14 = tpu.matmul %12, %13, %cst_14 {dimension_numbers = #tpu.dot_dimension_numbers<[1], [0], [0], [1], [0, 0, 1, 1], [], []>} : vector<128x128xbf16>, vector<128x32xbf16>, vector<128x32xf32> -> vector<128x32xf32>
      %c0_15 = arith.constant 0 : index
      %c0_16 = arith.constant 0 : index
      %15 = vector.load %arg11[%c0_15, %c0_16] : memref<128x32xf32, #tpu.memory_space<vmem>>, vector<128x32xf32>
      %c0_17 = arith.constant 0 : index
      %c0_18 = arith.constant 0 : index
      %16 = vector.load %arg5[%c0_17, %c0_18] : memref<128x1xf32, #tpu.memory_space<vmem>>, vector<128x1xf32>
      %17 = vector.broadcast %16 : vector<128x1xf32> to vector<128x32xf32>
      %18 = arith.mulf %15, %17 : vector<128x32xf32>
      %c0_19 = arith.constant 0 : index
      %c0_20 = arith.constant 0 : index
      %19 = vector.load %arg7[%c0_19, %c0_20] : memref<1x32xf32, #tpu.memory_space<vmem>>, vector<1x32xf32>
      %20 = vector.broadcast %19 : vector<1x32xf32> to vector<128x32xf32>
      %21 = arith.addf %18, %20 : vector<128x32xf32>
      %22 = arith.addf %21, %14 : vector<128x32xf32>
      %cst_21 = arith.constant 0.000000e+00 : f32
      %23 = vector.broadcast %cst_21 : f32 to vector<128x32xf32>
      %24 = arith.maximumf %22, %23 : vector<128x32xf32>
      %c0_22 = arith.constant 0 : index
      %c0_23 = arith.constant 0 : index
      %25 = vector.load %arg8[%c0_22, %c0_23] : memref<32x128xf32, #tpu.memory_space<vmem>>, vector<32x128xf32>
      %cst_24 = arith.constant dense<0.000000e+00> : vector<128x128xf32>
      %26 = tpu.matmul %24, %25, %cst_24 {dimension_numbers = #tpu.dot_dimension_numbers<[1], [0], [0], [1], [0, 0, 1, 1], [], []>} : vector<128x32xf32>, vector<32x128xf32>, vector<128x128xf32> -> vector<128x128xf32>
      %c0_25 = arith.constant 0 : index
      %c0_26 = arith.constant 0 : index
      %27 = vector.load %arg9[%c0_25, %c0_26] : memref<1x128xf32, #tpu.memory_space<vmem>>, vector<1x128xf32>
      %28 = vector.broadcast %27 : vector<1x128xf32> to vector<128x128xf32>
      %29 = arith.addf %26, %28 : vector<128x128xf32>
      %c0_27 = arith.constant 0 : index
      %c0_28 = arith.constant 0 : index
      %30 = vector.load %arg10[%c0_27, %c0_28] : memref<128x128xf32, #tpu.memory_space<vmem>>, vector<128x128xf32>
      tpu.vector_store %arg10[%c0_27, %c0_28], %29 {strides = array<i32>} : memref<128x128xf32, #tpu.memory_space<vmem>>, vector<128x128xf32>,
    } else {
    }
    return
  }
  func.func @transform_0(%arg0: i32, %arg1: i32) -> (i32, i32) {
    %c0_i32 = arith.constant 0 : i32
    return %arg0, %arg1 : i32, i32
  }
  func.func @transform_1(%arg0: i32, %arg1: i32) -> (i32, i32) {
    %c0_i32 = arith.constant 0 : i32
    %c0_i32_0 = arith.constant 0 : i32
    return %arg1, %c0_i32 : i32, i32
  }
  func.func @transform_2(%arg0: i32, %arg1: i32) -> (i32, i32) {
    %c0_i32 = arith.constant 0 : i32
    %c0_i32_0 = arith.constant 0 : i32
    return %arg0, %c0_i32 : i32, i32
  }
  func.func @transform_3(%arg0: i32, %arg1: i32) -> (i32, i32) {
    %c0_i32 = arith.constant 0 : i32
    %c0_i32_0 = arith.constant 0 : i32
    return %arg0, %c0_i32 : i32, i32
  }
  func.func @transform_4(%arg0: i32, %arg1: i32) -> (i32, i32) {
    %c0_i32 = arith.constant 0 : i32
    %c0_i32_0 = arith.constant 0 : i32
    %c0_i32_1 = arith.constant 0 : i32
    return %c0_i32, %c0_i32_0 : i32, i32
  }
  func.func @transform_5(%arg0: i32, %arg1: i32) -> (i32, i32) {
    %c0_i32 = arith.constant 0 : i32
    %c0_i32_0 = arith.constant 0 : i32
    %c0_i32_1 = arith.constant 0 : i32
    return %c0_i32, %c0_i32_0 : i32, i32
  }
  func.func @transform_6(%arg0: i32, %arg1: i32) -> (i32, i32) {
    %c0_i32 = arith.constant 0 : i32
    %c0_i32_0 = arith.constant 0 : i32
    %c0_i32_1 = arith.constant 0 : i32
    return %c0_i32, %c0_i32_0 : i32, i32
  }
  func.func @transform_7(%arg0: i32, %arg1: i32) -> (i32, i32) {
    %c0_i32 = arith.constant 0 : i32
    %c0_i32_0 = arith.constant 0 : i32
    %c0_i32_1 = arith.constant 0 : i32
    return %c0_i32, %c0_i32_0 : i32, i32
  }
  func.func @transform_8(%arg0: i32, %arg1: i32) -> (i32, i32) {
    %c0_i32 = arith.constant 0 : i32
    %c0_i32_0 = arith.constant 0 : i32
    return %arg0, %c0_i32 : i32, i32
  }
}

</mosaic_0001>

<llo_original>
// kernel: sage_extract.2
$region0: #{sage_extract.2}
  #allocation0 [shape = 'u32[]', space=smem, size = 0x4, offset = 0x4, fixed_abs, tag = 'smem constant byte address 0x4 - core index']
  #allocation1 [shape = 'u32[72,128]{1,0:T(1,128)}', space=vmem, size = 0x9000, scoped, tag = 'internal scratch']
  #allocation2 [shape = 'f32[128,128]{1,0:T(8,128)}', space=vmem, size = 0x10000, scoped, tag = 'scratch operand']
  %s0 = inlined_call_operand.vmem [shape: bf16[128,128], index: 0, kind: input, shape index: {}]
  %s1 = inlined_call_operand.vmem [shape: bf16[128,128], index: 1, kind: input, shape index: {}]
  %s2 = inlined_call_operand.vmem [shape: bf16[128,8], index: 2, kind: input, shape index: {}]
  %s3 = inlined_call_operand.vmem [shape: f32[128,1], index: 3, kind: input, shape index: {}]
  %s4 = inlined_call_operand.vmem [shape: bf16[8,128], index: 4, kind: input, shape index: {}]
  %s5 = inlined_call_operand.vmem [shape: f32[1,128], index: 5, kind: input, shape index: {}]
  %s6 = inlined_call_operand.vmem [shape: bf16[128,128], index: 6, kind: output, shape index: {}]
  %s7 = sld [smem:[#allocation0]]
  $region42: #{sage_extract.2} parent=0
    _
  %s9 = ssub.s32 1, %s7
  %s10 = scalar_select 0, %s9, %s7
  // Predicated region
  $region2: #{sage_extract.2} parent=0 // pred_check
    _
  $region3: #{sage_extract.2} parent=0 // pred_check_branch
    %12 = sbr.rel (0) target = $region5
  $region4: #{sage_extract.2} parent=0 // pred_region
    _
  $region5: #{sage_extract.2} parent=0 // pred_fallthru
    _
  // Predicated region
  $region6: #{sage_extract.2} parent=0 // pred_check
    _
  $region7: #{sage_extract.2} parent=0 // pred_check_branch
    %14 = sbr.rel (0) target = $region9
  $region8: #{sage_extract.2} parent=0 // pred_region
    _
  $region9: #{sage_extract.2} parent=0 // pred_fallthru
    _
  // Predicated region
  $region10: #{sage_extract.2} parent=0 // pred_check
    _
  $region11: #{sage_extract.2} parent=0 // pred_check_branch
    %16 = sbr.rel (0) target = $region13
  $region12: #{sage_extract.2} parent=0 // pred_region
    _
  $region13: #{sage_extract.2} parent=0 // pred_fallthru
    _
  // Predicated region
  $region14: #{sage_extract.2} parent=0 // pred_check
    _
  $region15: #{sage_extract.2} parent=0 // pred_check_branch
    %18 = sbr.rel (0) target = $region17
  $region16: #{sage_extract.2} parent=0 // pred_region
    _
  $region17: #{sage_extract.2} parent=0 // pred_fallthru
    _
  // Predicated region
  $region18: #{sage_extract.2} parent=0 // pred_check
    _
  $region19: #{sage_extract.2} parent=0 // pred_check_branch
    %20 = sbr.rel (0) target = $region21
  $region20: #{sage_extract.2} parent=0 // pred_region
    _
  $region21: #{sage_extract.2} parent=0 // pred_fallthru
    _
  // Predicated region
  $region22: #{sage_extract.2} parent=0 // pred_check
    _
  $region23: #{sage_extract.2} parent=0 // pred_check_branch
    %22 = sbr.rel (0) target = $region25
  $region24: #{sage_extract.2} parent=0 // pred_region
    _
  $region25: #{sage_extract.2} parent=0 // pred_fallthru
    _
  %p24 = scmp.eq.s32.totalorder 0, 0
  // Predicated region
  $region26: #{sage_extract.2} parent=0 // pred_check
    %p25 = pneg %p24
  $region27: #{sage_extract.2} parent=0 // pred_check_branch
    %27 = sbr.rel (%p25) target = $region29
  $region28: #{sage_extract.2} parent=0 // pred_region
    %28 = vst [vmem:[#allocation2] sm:$0xff] 0.0
    %29 = vst [vmem:[#allocation2 + $0x8] sm:$0xff] 0.0
    %30 = vst [vmem:[#allocation2 + $0x10] sm:$0xff] 0.0
    %31 = vst [vmem:[#allocation2 + $0x18] sm:$0xff] 0.0
    %32 = vst [vmem:[#allocation2 + $0x20] sm:$0xff] 0.0
    %33 = vst [vmem:[#allocation2 + $0x28] sm:$0xff] 0.0
    %34 = vst [vmem:[#allocation2 + $0x30] sm:$0xff] 0.0
    %35 = vst [vmem:[#allocation2 + $0x38] sm:$0xff] 0.0
    %36 = vst [vmem:[#allocation2 + $0x40] sm:$0xff] 0.0
    %37 = vst [vmem:[#allocation2 + $0x48] sm:$0xff] 0.0
    %38 = vst [vmem:[#allocation2 + $0x50] sm:$0xff] 0.0
    %39 = vst [vmem:[#allocation2 + $0x58] sm:$0xff] 0.0
    %40 = vst [vmem:[#allocation2 + $0x60] sm:$0xff] 0.0
    %41 = vst [vmem:[#allocation2 + $0x68] sm:$0xff] 0.0
    %42 = vst [vmem:[#allocation2 + $0x70] sm:$0xff] 0.0
    %43 = vst [vmem:[#allocation2 + $0x78] sm:$0xff] 0.0
  $region29: #{sage_extract.2} parent=0 // pred_fallthru
    _
  %v44 = vld [vmem:[#allocation2] sm:$0xff]
  %v45 = vld [vmem:[#allocation2 + $0x8] sm:$0xff]
  %v46 = vld [vmem:[#allocation2 + $0x10] sm:$0xff]
  %v47 = vld [vmem:[#allocation2 + $0x18] sm:$0xff]
  %v48 = vld [vmem:[#allocation2 + $0x20] sm:$0xff]
  %v49 = vld [vmem:[#allocation2 + $0x28] sm:$0xff]
  %v50 = vld [vmem:[#allocation2 + $0x30] sm:$0xff]
  %v51 = vld [vmem:[#allocation2 + $0x38] sm:$0xff]
  %v52 = vld [vmem:[#allocation2 + $0x40] sm:$0xff]
  %v53 = vld [vmem:[#allocation2 + $0x48] sm:$0xff]
  %v54 = vld [vmem:[#allocation2 + $0x50] sm:$0xff]
  %v55 = vld [vmem:[#allocation2 + $0x58] sm:$0xff]
  %v56 = vld [vmem:[#allocation2 + $0x60] sm:$0xff]
  %v57 = vld [vmem:[#allocation2 + $0x68] sm:$0xff]
  %v58 = vld [vmem:[#allocation2 + $0x70] sm:$0xff]
  %v59 = vld [vmem:[#allocation2 + $0x78] sm:$0xff]
  %v60 = vld [vmem:[%s0] sm:$0xf]
  %v61 = vld [vmem:[%s0 + $0x4] sm:$0xf]
  %v62 = vld [vmem:[%s0 + $0x8] sm:$0xf]
  %v63 = vld [vmem:[%s0 + $0xc] sm:$0xf]
  %v64 = vld [vmem:[%s0 + $0x10] sm:$0xf]
  %v65 = vld [vmem:[%s0 + $0x14] sm:$0xf]
  %v66 = vld [vmem:[%s0 + $0x18] sm:$0xf]
  %v67 = vld [vmem:[%s0 + $0x1c] sm:$0xf]
  %v68 = vld [vmem:[%s0 + $0x20] sm:$0xf]
  %v69 = vld [vmem:[%s0 + $0x24] sm:$0xf]
  %v70 = vld [vmem:[%s0 + $0x28] sm:$0xf]
  %v71 = vld [vmem:[%s0 + $0x2c] sm:$0xf]
  %v72 = vld [vmem:[%s0 + $0x30] sm:$0xf]
  %v73 = vld [vmem:[%s0 + $0x34] sm:$0xf]
  %v74 = vld [vmem:[%s0 + $0x38] sm:$0xf]
  %v75 = vld [vmem:[%s0 + $0x3c] sm:$0xf]
  %v76 = vld [vmem:[%s1] sm:$0xf]
  %v77 = vld [vmem:[%s1 + $0x4] sm:$0xf]
  %v78 = vld [vmem:[%s1 + $0x8] sm:$0xf]
  %v79 = vld [vmem:[%s1 + $0xc] sm:$0xf]
  %v80 = vld [vmem:[%s1 + $0x10] sm:$0xf]
  %v81 = vld [vmem:[%s1 + $0x14] sm:$0xf]
  %v82 = vld [vmem:[%s1 + $0x18] sm:$0xf]
  %v83 = vld [vmem:[%s1 + $0x1c] sm:$0xf]
  %v84 = vld [vmem:[%s1 + $0x20] sm:$0xf]
  %v85 = vld [vmem:[%s1 + $0x24] sm:$0xf]
  %v86 = vld [vmem:[%s1 + $0x28] sm:$0xf]
  %v87 = vld [vmem:[%s1 + $0x2c] sm:$0xf]
  %v88 = vld [vmem:[%s1 + $0x30] sm:$0xf]
  %v89 = vld [vmem:[%s1 + $0x34] sm:$0xf]
  %v90 = vld [vmem:[%s1 + $0x38] sm:$0xf]
  %v91 = vld [vmem:[%s1 + $0x3c] sm:$0xf]
  %v108 = vunpack.c.l.b16 %v60
  %v109 = vunpack.c.l.b16 %v61
  %v110 = vunpack.c.l.b16 %v62
  %v111 = vunpack.c.l.b16 %v63
  %v112 = vunpack.c.l.b16 %v64
  %v113 = vunpack.c.l.b16 %v65
  %v114 = vunpack.c.l.b16 %v66
  %v115 = vunpack.c.l.b16 %v67
  %v116 = vunpack.c.l.b16 %v68
  %v117 = vunpack.c.l.b16 %v69
  %v118 = vunpack.c.l.b16 %v70
  %v119 = vunpack.c.l.b16 %v71
  %v120 = vunpack.c.l.b16 %v72
  %v121 = vunpack.c.l.b16 %v73
  %v122 = vunpack.c.l.b16 %v74
  %v123 = vunpack.c.l.b16 %v75
  %v124 = vpack.c.b16 %v109, %v108
  %v125 = vpack.c.b16 %v111, %v110
  %v126 = vpack.c.b16 %v113, %v112
  %v127 = vpack.c.b16 %v115, %v114
  %v128 = vpack.c.b16 %v117, %v116
  %v129 = vpack.c.b16 %v119, %v118
  %v130 = vpack.c.b16 %v121, %v120
  %v131 = vpack.c.b16 %v123, %v122
  %v156 = vunpack.c.l.b16 %v76
  %v157 = vunpack.c.l.b16 %v77
  %v158 = vunpack.c.l.b16 %v78
  %v159 = vunpack.c.l.b16 %v79
  %v160 = vunpack.c.l.b16 %v80
  %v161 = vunpack.c.l.b16 %v81
  %v162 = vunpack.c.l.b16 %v82
  %v163 = vunpack.c.l.b16 %v83
  %v164 = vunpack.c.l.b16 %v84
  %v165 = vunpack.c.l.b16 %v85
  %v166 = vunpack.c.l.b16 %v86
  %v167 = vunpack.c.l.b16 %v87
  %v168 = vunpack.c.l.b16 %v88
  %v169 = vunpack.c.l.b16 %v89
  %v170 = vunpack.c.l.b16 %v90
  %v171 = vunpack.c.l.b16 %v91
  %v172 = vpack.c.b16 %v157, %v156
  %v173 = vpack.c.b16 %v159, %v158
  %v174 = vpack.c.b16 %v161, %v160
  %v175 = vpack.c.b16 %v163, %v162
  %v176 = vpack.c.b16 %v165, %v164
  %v177 = vpack.c.b16 %v167, %v166
  %v178 = vpack.c.b16 %v169, %v168
  %v179 = vpack.c.b16 %v171, %v170
  %188 = vmatpush.bf16.msra.mxu0 %v179
  %189 = vmatpush.bf16.msra.mxu0 %v178
  %190 = vmatpush.bf16.msra.mxu0 %v177
  %191 = vmatpush.bf16.msra.mxu0 %v176
  %192 = vmatpush.bf16.msra.mxu0 %v175
  %193 = vmatpush.bf16.msra.mxu0 %v174
  %194 = vmatpush.bf16.msra.mxu0 %v173
  %195 = vmatpush.bf16.msra.mxu0 %v172
  %196 = vmatmul.bf16.gmra.mxu0 %v124
  %v197 = vpop.f32.mrf.mxu0
  %v198 = vadd.f32 0.0, %v197
  %v199 = vpop.f32.mrf.mxu0
  %v200 = vadd.f32 0.0, %v199
  %201 = vmatmul.bf16.gmra.mxu0 %v125
  %v202 = vpop.f32.mrf.mxu0
  %v203 = vadd.f32 0.0, %v202
  %v204 = vpop.f32.mrf.mxu0
  %v205 = vadd.f32 0.0, %v204
  %206 = vmatmul.bf16.gmra.mxu0 %v126
  %v207 = vpop.f32.mrf.mxu0
  %v208 = vadd.f32 0.0, %v207
  %v209 = vpop.f32.mrf.mxu0
  %v210 = vadd.f32 0.0, %v209
  %211 = vmatmul.bf16.gmra.mxu0 %v127
  %v212 = vpop.f32.mrf.mxu0
  %v213 = vadd.f32 0.0, %v212
  %v214 = vpop.f32.mrf.mxu0
  %v215 = vadd.f32 0.0, %v214
  %216 = vmatmul.bf16.gmra.mxu0 %v128
  %v217 = vpop.f32.mrf.mxu0
  %v218 = vadd.f32 0.0, %v217
  %v219 = vpop.f32.mrf.mxu0
  %v220 = vadd.f32 0.0, %v219
  %221 = vmatmul.bf16.gmra.mxu0 %v129
  %v222 = vpop.f32.mrf.mxu0
  %v223 = vadd.f32 0.0, %v222
  %v224 = vpop.f32.mrf.mxu0
  %v225 = vadd.f32 0.0, %v224
  %226 = vmatmul.bf16.gmra.mxu0 %v130
  %v227 = vpop.f32.mrf.mxu0
  %v228 = vadd.f32 0.0, %v227
  %v229 = vpop.f32.mrf.mxu0
  %v230 = vadd.f32 0.0, %v229
  %231 = vmatmul.bf16.gmra.mxu0 %v131
  %v232 = vpop.f32.mrf.mxu0
  %v233 = vadd.f32 0.0, %v232
  %v234 = vpop.f32.mrf.mxu0
  %v235 = vadd.f32 0.0, %v234
  %236 = vdwg.mxu0
  %v237 = vadd.f32 %v44, %v198
  %v238 = vadd.f32 %v45, %v200
  %v239 = vadd.f32 %v46, %v203
  %v240 = vadd.f32 %v47, %v205
  %v241 = vadd.f32 %v48, %v208
  %v242 = vadd.f32 %v49, %v210
  %v243 = vadd.f32 %v50, %v213
  %v244 = vadd.f32 %v51, %v215
  %v245 = vadd.f32 %v52, %v218
  %v246 = vadd.f32 %v53, %v220
  %v247 = vadd.f32 %v54, %v223
  %v248 = vadd.f32 %v55, %v225
  %v249 = vadd.f32 %v56, %v228
  %v250 = vadd.f32 %v57, %v230
  %v251 = vadd.f32 %v58, %v233
  %v252 = vadd.f32 %v59, %v235
  %253 = vst [vmem:[#allocation2] sm:$0xff] %v237
  %254 = vst [vmem:[#allocation2 + $0x8] sm:$0xff] %v238
  %255 = vst [vmem:[#allocation2 + $0x10] sm:$0xff] %v239
  %256 = vst [vmem:[#allocation2 + $0x18] sm:$0xff] %v240
  %257 = vst [vmem:[#allocation2 + $0x20] sm:$0xff] %v241
  %258 = vst [vmem:[#allocation2 + $0x28] sm:$0xff] %v242
  %259 = vst [vmem:[#allocation2 + $0x30] sm:$0xff] %v243
  %260 = vst [vmem:[#allocation2 + $0x38] sm:$0xff] %v244
  %261 = vst [vmem:[#allocation2 + $0x40] sm:$0xff] %v245
  %262 = vst [vmem:[#allocation2 + $0x48] sm:$0xff] %v246
  %263 = vst [vmem:[#allocation2 + $0x50] sm:$0xff] %v247
  %264 = vst [vmem:[#allocation2 + $0x58] sm:$0xff] %v248
  %265 = vst [vmem:[#allocation2 + $0x60] sm:$0xff] %v249
  %266 = vst [vmem:[#allocation2 + $0x68] sm:$0xff] %v250
  %267 = vst [vmem:[#allocation2 + $0x70] sm:$0xff] %v251
  %268 = vst [vmem:[#allocation2 + $0x78] sm:$0xff] %v252
  // Predicated region
  $region30: #{sage_extract.2} parent=0 // pred_check
    %p269 = pneg %p24
  $region31: #{sage_extract.2} parent=0 // pred_check_branch
    %271 = sbr.rel (%p269) target = $region33
  $region32: #{sage_extract.2} parent=0 // pred_region
    %v272 = vld [vmem:[%s2] sm:$0xf]
    %v273 = vld [vmem:[%s2 + $0x4] sm:$0xf]
    %v274 = vld [vmem:[%s2 + $0x8] sm:$0xf]
    %v275 = vld [vmem:[%s2 + $0xc] sm:$0xf]
    %v276 = vld [vmem:[%s2 + $0x10] sm:$0xf]
    %v277 = vld [vmem:[%s2 + $0x14] sm:$0xf]
    %v278 = vld [vmem:[%s2 + $0x18] sm:$0xf]
    %v279 = vld [vmem:[%s2 + $0x1c] sm:$0xf]
    %v280 = vld [vmem:[%s2 + $0x20] sm:$0xf]
    %v281 = vld [vmem:[%s2 + $0x24] sm:$0xf]
    %v282 = vld [vmem:[%s2 + $0x28] sm:$0xf]
    %v283 = vld [vmem:[%s2 + $0x2c] sm:$0xf]
    %v284 = vld [vmem:[%s2 + $0x30] sm:$0xf]
    %v285 = vld [vmem:[%s2 + $0x34] sm:$0xf]
    %v286 = vld [vmem:[%s2 + $0x38] sm:$0xf]
    %v287 = vld [vmem:[%s2 + $0x3c] sm:$0xf]
    %v288 = vld [vmem:[%s4] sm:$0xf]
    %v305 = vunpack.c.l.b16 %v272
    %v306 = vunpack.c.l.b16 %v273
    %v307 = vunpack.c.l.b16 %v274
    %v308 = vunpack.c.l.b16 %v275
    %v309 = vunpack.c.l.b16 %v276
    %v310 = vunpack.c.l.b16 %v277
    %v311 = vunpack.c.l.b16 %v278
    %v312 = vunpack.c.l.b16 %v279
    %v313 = vunpack.c.l.b16 %v280
    %v314 = vunpack.c.l.b16 %v281
    %v315 = vunpack.c.l.b16 %v282
    %v316 = vunpack.c.l.b16 %v283
    %v317 = vunpack.c.l.b16 %v284
    %v318 = vunpack.c.l.b16 %v285
    %v319 = vunpack.c.l.b16 %v286
    %v320 = vunpack.c.l.b16 %v287
    %v321 = vpack.c.b16 %v306, %v305
    %v322 = vpack.c.b16 %v308, %v307
    %v323 = vpack.c.b16 %v310, %v309
    %v324 = vpack.c.b16 %v312, %v311
    %v325 = vpack.c.b16 %v314, %v313
    %v326 = vpack.c.b16 %v316, %v315
    %v327 = vpack.c.b16 %v318, %v317
    %v328 = vpack.c.b16 %v320, %v319
    %vm329 = vcmask 64512
    %v331 = vsel %vm329, %v321, 0
    %v334 = vsel %vm329, %v322, 0
    %v337 = vsel %vm329, %v323, 0
    %v340 = vsel %vm329, %v324, 0
    %v343 = vsel %vm329, %v325, 0
    %v346 = vsel %vm329, %v326, 0
    %v349 = vsel %vm329, %v327, 0
    %v352 = vsel %vm329, %v328, 0
    %vm354 = vcmask 1043456
    %v356 = vsel %vm354, %v288, 0
    %358 = vmatpush.bf16.msra.mxu0 0
    %359 = vmatpush.bf16.msra.mxu0 0
    %360 = vmatpush.bf16.msra.mxu0 0
    %361 = vmatpush.bf16.msra.mxu0 0
    %362 = vmatpush.bf16.msra.mxu0 0
    %363 = vmatpush.bf16.msra.mxu0 0
    %364 = vmatpush.bf16.msra.mxu0 0
    %365 = vmatpush.bf16.msra.mxu0 %v356
    %366 = vmatmul.bf16.gmra.mxu0 %v331
    %v367 = vpop.f32.mrf.mxu0
    %v368 = vadd.f32 0.0, %v367
    %v369 = vpop.f32.mrf.mxu0
    %v370 = vadd.f32 0.0, %v369
    %371 = vmatmul.bf16.gmra.mxu0 %v334
    %v372 = vpop.f32.mrf.mxu0
    %v373 = vadd.f32 0.0, %v372
    %v374 = vpop.f32.mrf.mxu0
    %v375 = vadd.f32 0.0, %v374
    %376 = vmatmul.bf16.gmra.mxu0 %v337
    %v377 = vpop.f32.mrf.mxu0
    %v378 = vadd.f32 0.0, %v377
    %v379 = vpop.f32.mrf.mxu0
    %v380 = vadd.f32 0.0, %v379
    %381 = vmatmul.bf16.gmra.mxu0 %v340
    %v382 = vpop.f32.mrf.mxu0
    %v383 = vadd.f32 0.0, %v382
    %v384 = vpop.f32.mrf.mxu0
    %v385 = vadd.f32 0.0, %v384
    %386 = vmatmul.bf16.gmra.mxu0 %v343
    %v387 = vpop.f32.mrf.mxu0
    %v388 = vadd.f32 0.0, %v387
    %v389 = vpop.f32.mrf.mxu0
    %v390 = vadd.f32 0.0, %v389
    %391 = vmatmul.bf16.gmra.mxu0 %v346
    %v392 = vpop.f32.mrf.mxu0
    %v393 = vadd.f32 0.0, %v392
    %v394 = vpop.f32.mrf.mxu0
    %v395 = vadd.f32 0.0, %v394
    %396 = vmatmul.bf16.gmra.mxu0 %v349
    %v397 = vpop.f32.mrf.mxu0
    %v398 = vadd.f32 0.0, %v397
    %v399 = vpop.f32.mrf.mxu0
    %v400 = vadd.f32 0.0, %v399
    %401 = vmatmul.bf16.gmra.mxu0 %v352
    %v402 = vpop.f32.mrf.mxu0
    %v403 = vadd.f32 0.0, %v402
    %v404 = vpop.f32.mrf.mxu0
    %v405 = vadd.f32 0.0, %v404
    %406 = vdwg.mxu0
    %v407 = vld [vmem:[#allocation2] sm:$0xff]
    %v408 = vld [vmem:[#allocation2 + $0x8] sm:$0xff]
    %v409 = vld [vmem:[#allocation2 + $0x10] sm:$0xff]
    %v410 = vld [vmem:[#allocation2 + $0x18] sm:$0xff]
    %v411 = vld [vmem:[#allocation2 + $0x20] sm:$0xff]
    %v412 = vld [vmem:[#allocation2 + $0x28] sm:$0xff]
    %v413 = vld [vmem:[#allocation2 + $0x30] sm:$0xff]
    %v414 = vld [vmem:[#allocation2 + $0x38] sm:$0xff]
    %v415 = vld [vmem:[#allocation2 + $0x40] sm:$0xff]
    %v416 = vld [vmem:[#allocation2 + $0x48] sm:$0xff]
    %v417 = vld [vmem:[#allocation2 + $0x50] sm:$0xff]
    %v418 = vld [vmem:[#allocation2 + $0x58] sm:$0xff]
    %v419 = vld [vmem:[#allocation2 + $0x60] sm:$0xff]
    %v420 = vld [vmem:[#allocation2 + $0x68] sm:$0xff]
    %v421 = vld [vmem:[#allocation2 + $0x70] sm:$0xff]
    %v422 = vld [vmem:[#allocation2 + $0x78] sm:$0xff]
    %v423 = vld [vmem:[%s3] sm:$0xff]
    %v424 = vld [vmem:[%s3 + $0x8] sm:$0xff]
    %v425 = vld [vmem:[%s3 + $0x10] sm:$0xff]
    %v426 = vld [vmem:[%s3 + $0x18] sm:$0xff]
    %v427 = vld [vmem:[%s3 + $0x20] sm:$0xff]
    %v428 = vld [vmem:[%s3 + $0x28] sm:$0xff]
    %v429 = vld [vmem:[%s3 + $0x30] sm:$0xff]
    %v430 = vld [vmem:[%s3 + $0x38] sm:$0xff]
    %v431 = vld [vmem:[%s3 + $0x40] sm:$0xff]
    %v432 = vld [vmem:[%s3 + $0x48] sm:$0xff]
    %v433 = vld [vmem:[%s3 + $0x50] sm:$0xff]
    %v434 = vld [vmem:[%s3 + $0x58] sm:$0xff]
    %v435 = vld [vmem:[%s3 + $0x60] sm:$0xff]
    %v436 = vld [vmem:[%s3 + $0x68] sm:$0xff]
    %v437 = vld [vmem:[%s3 + $0x70] sm:$0xff]
    %v438 = vld [vmem:[%s3 + $0x78] sm:$0xff]
    %440 = vset.pattern.permute.xlu0 0
    %441 = vperm.xlu0 %440, %v423
    %v442 = vpop.permute.xlu0 %441
    %445 = vset.pattern.permute.xlu0 0
    %446 = vperm.xlu0 %445, %v424
    %v447 = vpop.permute.xlu0 %446
    %450 = vset.pattern.permute.xlu0 0
    %451 = vperm.xlu0 %450, %v425
    %v452 = vpop.permute.xlu0 %451
    %455 = vset.pattern.permute.xlu0 0
    %456 = vperm.xlu0 %455, %v426
    %v457 = vpop.permute.xlu0 %456
    %460 = vset.pattern.permute.xlu0 0
    %461 = vperm.xlu0 %460, %v427
    %v462 = vpop.permute.xlu0 %461
    %465 = vset.pattern.permute.xlu0 0
    %466 = vperm.xlu0 %465, %v428
    %v467 = vpop.permute.xlu0 %466
    %470 = vset.pattern.permute.xlu0 0
    %471 = vperm.xlu0 %470, %v429
    %v472 = vpop.permute.xlu0 %471
    %475 = vset.pattern.permute.xlu0 0
    %476 = vperm.xlu0 %475, %v430
    %v477 = vpop.permute.xlu0 %476
    %480 = vset.pattern.permute.xlu0 0
    %481 = vperm.xlu0 %480, %v431
    %v482 = vpop.permute.xlu0 %481
    %485 = vset.pattern.permute.xlu0 0
    %486 = vperm.xlu0 %485, %v432
    %v487 = vpop.permute.xlu0 %486
    %490 = vset.pattern.permute.xlu0 0
    %491 = vperm.xlu0 %490, %v433
    %v492 = vpop.permute.xlu0 %491
    %495 = vset.pattern.permute.xlu0 0
    %496 = vperm.xlu0 %495, %v434
    %v497 = vpop.permute.xlu0 %496
    %500 = vset.pattern.permute.xlu0 0
    %501 = vperm.xlu0 %500, %v435
    %v502 = vpop.permute.xlu0 %501
    %505 = vset.pattern.permute.xlu0 0
    %506 = vperm.xlu0 %505, %v436
    %v507 = vpop.permute.xlu0 %506
    %510 = vset.pattern.permute.xlu0 0
    %511 = vperm.xlu0 %510, %v437
    %v512 = vpop.permute.xlu0 %511
    %515 = vset.pattern.permute.xlu0 0
    %516 = vperm.xlu0 %515, %v438
    %v517 = vpop.permute.xlu0 %516
    %v519 = vmul.f32 %v407, %v442
    %v520 = vmul.f32 %v408, %v447
    %v521 = vmul.f32 %v409, %v452
    %v522 = vmul.f32 %v410, %v457
    %v523 = vmul.f32 %v411, %v462
    %v524 = vmul.f32 %v412, %v467
    %v525 = vmul.f32 %v413, %v472
    %v526 = vmul.f32 %v414, %v477
    %v527 = vmul.f32 %v415, %v482
    %v528 = vmul.f32 %v416, %v487
    %v529 = vmul.f32 %v417, %v492
    %v530 = vmul.f32 %v418, %v497
    %v531 = vmul.f32 %v419, %v502
    %v532 = vmul.f32 %v420, %v507
    %v533 = vmul.f32 %v421, %v512
    %v534 = vmul.f32 %v422, %v517
    %v535 = vld [vmem:[%s5] sm:$0x1]
    %v537 = vperm.slane %v535, 0
    %v539 = vadd.f32 %v519, %v537
    %v540 = vadd.f32 %v520, %v537
    %v541 = vadd.f32 %v521, %v537
    %v542 = vadd.f32 %v522, %v537
    %v543 = vadd.f32 %v523, %v537
    %v544 = vadd.f32 %v524, %v537
    %v545 = vadd.f32 %v525, %v537
    %v546 = vadd.f32 %v526, %v537
    %v547 = vadd.f32 %v527, %v537
    %v548 = vadd.f32 %v528, %v537
    %v549 = vadd.f32 %v529, %v537
    %v550 = vadd.f32 %v530, %v537
    %v551 = vadd.f32 %v531, %v537
    %v552 = vadd.f32 %v532, %v537
    %v553 = vadd.f32 %v533, %v537
    %v554 = vadd.f32 %v534, %v537
    %v555 = vadd.f32 %v539, %v368
    %v556 = vadd.f32 %v540, %v370
    %v557 = vadd.f32 %v541, %v373
    %v558 = vadd.f32 %v542, %v375
    %v559 = vadd.f32 %v543, %v378
    %v560 = vadd.f32 %v544, %v380
    %v561 = vadd.f32 %v545, %v383
    %v562 = vadd.f32 %v546, %v385
    %v563 = vadd.f32 %v547, %v388
    %v564 = vadd.f32 %v548, %v390
    %v565 = vadd.f32 %v549, %v393
    %v566 = vadd.f32 %v550, %v395
    %v567 = vadd.f32 %v551, %v398
    %v568 = vadd.f32 %v552, %v400
    %v569 = vadd.f32 %v553, %v403
    %v570 = vadd.f32 %v554, %v405
    %v571 = vmax.f32 %v555, 0.0
    %v572 = vmax.f32 %v556, 0.0
    %v573 = vmax.f32 %v557, 0.0
    %v574 = vmax.f32 %v558, 0.0
    %v575 = vmax.f32 %v559, 0.0
    %v576 = vmax.f32 %v560, 0.0
    %v577 = vmax.f32 %v561, 0.0
    %v578 = vmax.f32 %v562, 0.0
    %v579 = vmax.f32 %v563, 0.0
    %v580 = vmax.f32 %v564, 0.0
    %v581 = vmax.f32 %v565, 0.0
    %v582 = vmax.f32 %v566, 0.0
    %v583 = vmax.f32 %v567, 0.0
    %v584 = vmax.f32 %v568, 0.0
    %v585 = vmax.f32 %v569, 0.0
    %v586 = vmax.f32 %v570, 0.0
    %v587 = vpack.c.bf16 %v571, %v571
    %v588 = vpack.c.bf16 %v572, %v572
    %v589 = vpack.c.bf16 %v573, %v573
    %v590 = vpack.c.bf16 %v574, %v574
    %v591 = vpack.c.bf16 %v575, %v575
    %v592 = vpack.c.bf16 %v576, %v576
    %v593 = vpack.c.bf16 %v577, %v577
    %v594 = vpack.c.bf16 %v578, %v578
    %v595 = vpack.c.bf16 %v579, %v579
    %v596 = vpack.c.bf16 %v580, %v580
    %v597 = vpack.c.bf16 %v581, %v581
    %v598 = vpack.c.bf16 %v582, %v582
    %v599 = vpack.c.bf16 %v583, %v583
    %v600 = vpack.c.bf16 %v584, %v584
    %v601 = vpack.c.bf16 %v585, %v585
    %v602 = vpack.c.bf16 %v586, %v586
    %603 = vst [vmem:[%s6] sm:$0xf] %v587
    %604 = vst [vmem:[%s6 + $0x4] sm:$0xf] %v588
    %605 = vst [vmem:[%s6 + $0x8] sm:$0xf] %v589
    %606 = vst [vmem:[%s6 + $0xc] sm:$0xf] %v590
    %607 = vst [vmem:[%s6 + $0x10] sm:$0xf] %v591
    %608 = vst [vmem:[%s6 + $0x14] sm:$0xf] %v592
    %609 = vst [vmem:[%s6 + $0x18] sm:$0xf] %v593
    %610 = vst [vmem:[%s6 + $0x1c] sm:$0xf] %v594
    %611 = vst [vmem:[%s6 + $0x20] sm:$0xf] %v595
    %612 = vst [vmem:[%s6 + $0x24] sm:$0xf] %v596
    %613 = vst [vmem:[%s6 + $0x28] sm:$0xf] %v597
    %614 = vst [vmem:[%s6 + $0x2c] sm:$0xf] %v598
    %615 = vst [vmem:[%s6 + $0x30] sm:$0xf] %v599
    %616 = vst [vmem:[%s6 + $0x34] sm:$0xf] %v600
    %617 = vst [vmem:[%s6 + $0x38] sm:$0xf] %v601
    %618 = vst [vmem:[%s6 + $0x3c] sm:$0xf] %v602
  $region33: #{sage_extract.2} parent=0 // pred_fallthru
    _
  // Predicated region
  $region34: #{sage_extract.2} parent=0 // pred_check
    _
  $region35: #{sage_extract.2} parent=0 // pred_check_branch
    %620 = sbr.rel (0) target = $region37
  $region36: #{sage_extract.2} parent=0 // pred_region
    _
  $region37: #{sage_extract.2} parent=0 // pred_fallthru
    _
  // Predicated region
  $region38: #{sage_extract.2} parent=0 // pred_check
    _
  $region39: #{sage_extract.2} parent=0 // pred_check_branch
    %622 = sbr.rel (0) target = $region41
  $region40: #{sage_extract.2} parent=0 // pred_region
    _
  $region41: #{sage_extract.2} parent=0 // pred_fallthru
    _

// kernel: sage_extract.3
$region0: #{sage_extract.3}
  #allocation0 [shape = 'u32[]', space=smem, size = 0x4, offset = 0x4, fixed_abs, tag = 'smem constant byte address 0x4 - core index']
  #allocation1 [shape = 'u32[72,128]{1,0:T(1,128)}', space=vmem, size = 0x9000, scoped, tag = 'internal scratch']
  #allocation2 [shape = 'f32[128,32]{1,0:T(8,128)}', space=vmem, size = 0x10000, scoped, tag = 'scratch operand']
  %s0 = inlined_call_operand.vmem [shape: bf16[128,128], index: 0, kind: input, shape index: {}]
  %s1 = inlined_call_operand.vmem [shape: bf16[128,32], index: 1, kind: input, shape index: {}]
  %s2 = inlined_call_operand.vmem [shape: bf16[128,128], index: 2, kind: input, shape index: {}]
  %s3 = inlined_call_operand.vmem [shape: f32[128,1], index: 3, kind: input, shape index: {}]
  %s4 = inlined_call_operand.vmem [shape: bf16[128,32], index: 4, kind: input, shape index: {}]
  %s5 = inlined_call_operand.vmem [shape: f32[1,32], index: 5, kind: input, shape index: {}]
  %s6 = inlined_call_operand.vmem [shape: f32[32,128], index: 6, kind: input, shape index: {}]
  %s7 = inlined_call_operand.vmem [shape: f32[1,128], index: 7, kind: input, shape index: {}]
  %s8 = inlined_call_operand.vmem [shape: f32[128,128], index: 8, kind: output, shape index: {}]
  %s9 = sld [smem:[#allocation0]]
  $region50: #{sage_extract.3} parent=0
    _
  %s11 = ssub.s32 1, %s9
  %s12 = scalar_select 0, %s11, %s9
  // Predicated region
  $region2: #{sage_extract.3} parent=0 // pred_check
    _
  $region3: #{sage_extract.3} parent=0 // pred_check_branch
    %14 = sbr.rel (0) target = $region5
  $region4: #{sage_extract.3} parent=0 // pred_region
    _
  $region5: #{sage_extract.3} parent=0 // pred_fallthru
    _
  // Predicated region
  $region6: #{sage_extract.3} parent=0 // pred_check
    _
  $region7: #{sage_extract.3} parent=0 // pred_check_branch
    %16 = sbr.rel (0) target = $region9
  $region8: #{sage_extract.3} parent=0 // pred_region
    _
  $region9: #{sage_extract.3} parent=0 // pred_fallthru
    _
  // Predicated region
  $region10: #{sage_extract.3} parent=0 // pred_check
    _
  $region11: #{sage_extract.3} parent=0 // pred_check_branch
    %18 = sbr.rel (0) target = $region13
  $region12: #{sage_extract.3} parent=0 // pred_region
    _
  $region13: #{sage_extract.3} parent=0 // pred_fallthru
    _
  // Predicated region
  $region14: #{sage_extract.3} parent=0 // pred_check
    _
  $region15: #{sage_extract.3} parent=0 // pred_check_branch
    %20 = sbr.rel (0) target = $region17
  $region16: #{sage_extract.3} parent=0 // pred_region
    _
  $region17: #{sage_extract.3} parent=0 // pred_fallthru
    _
  // Predicated region
  $region18: #{sage_extract.3} parent=0 // pred_check
    _
  $region19: #{sage_extract.3} parent=0 // pred_check_branch
    %22 = sbr.rel (0) target = $region21
  $region20: #{sage_extract.3} parent=0 // pred_region
    _
  $region21: #{sage_extract.3} parent=0 // pred_fallthru
    _
  // Predicated region
  $region22: #{sage_extract.3} parent=0 // pred_check
    _
  $region23: #{sage_extract.3} parent=0 // pred_check_branch
    %24 = sbr.rel (0) target = $region25
  $region24: #{sage_extract.3} parent=0 // pred_region
    _
  $region25: #{sage_extract.3} parent=0 // pred_fallthru
    _
  // Predicated region
  $region26: #{sage_extract.3} parent=0 // pred_check
    _
  $region27: #{sage_extract.3} parent=0 // pred_check_branch
    %26 = sbr.rel (0) target = $region29
  $region28: #{sage_extract.3} parent=0 // pred_region
    _
  $region29: #{sage_extract.3} parent=0 // pred_fallthru
    _
  // Predicated region
  $region30: #{sage_extract.3} parent=0 // pred_check
    _
  $region31: #{sage_extract.3} parent=0 // pred_check_branch
    %28 = sbr.rel (0) target = $region33
  $region32: #{sage_extract.3} parent=0 // pred_region
    _
  $region33: #{sage_extract.3} parent=0 // pred_fallthru
    _
  %p29 = scmp.eq.s32.totalorder 0, 0
  // Predicated region
  $region34: #{sage_extract.3} parent=0 // pred_check
    %p30 = pneg %p29
  $region35: #{sage_extract.3} parent=0 // pred_check_branch
    %32 = sbr.rel (%p30) target = $region37
  $region36: #{sage_extract.3} parent=0 // pred_region
    %vm33 = vcmask 261120
    %34 = vst.msk [vmem:[#allocation2] sm:$0xff] %vm33, 0.0
    %35 = vst.msk [vmem:[#allocation2 + $0x8] sm:$0xff] %vm33, 0.0
    %36 = vst.msk [vmem:[#allocation2 + $0x10] sm:$0xff] %vm33, 0.0
    %37 = vst.msk [vmem:[#allocation2 + $0x18] sm:$0xff] %vm33, 0.0
    %38 = vst.msk [vmem:[#allocation2 + $0x20] sm:$0xff] %vm33, 0.0
    %39 = vst.msk [vmem:[#allocation2 + $0x28] sm:$0xff] %vm33, 0.0
    %40 = vst.msk [vmem:[#allocation2 + $0x30] sm:$0xff] %vm33, 0.0
    %41 = vst.msk [vmem:[#allocation2 + $0x38] sm:$0xff] %vm33, 0.0
    %42 = vst.msk [vmem:[#allocation2 + $0x40] sm:$0xff] %vm33, 0.0
    %43 = vst.msk [vmem:[#allocation2 + $0x48] sm:$0xff] %vm33, 0.0
    %44 = vst.msk [vmem:[#allocation2 + $0x50] sm:$0xff] %vm33, 0.0
    %45 = vst.msk [vmem:[#allocation2 + $0x58] sm:$0xff] %vm33, 0.0
    %46 = vst.msk [vmem:[#allocation2 + $0x60] sm:$0xff] %vm33, 0.0
    %47 = vst.msk [vmem:[#allocation2 + $0x68] sm:$0xff] %vm33, 0.0
    %48 = vst.msk [vmem:[#allocation2 + $0x70] sm:$0xff] %vm33, 0.0
    %49 = vst.msk [vmem:[#allocation2 + $0x78] sm:$0xff] %vm33, 0.0
  $region37: #{sage_extract.3} parent=0 // pred_fallthru
    _
  %v50 = vld [vmem:[#allocation2] sm:$0xff]
  %v51 = vld [vmem:[#allocation2 + $0x8] sm:$0xff]
  %v52 = vld [vmem:[#allocation2 + $0x10] sm:$0xff]
  %v53 = vld [vmem:[#allocation2 + $0x18] sm:$0xff]
  %v54 = vld [vmem:[#allocation2 + $0x20] sm:$0xff]
  %v55 = vld [vmem:[#allocation2 + $0x28] sm:$0xff]
  %v56 = vld [vmem:[#allocation2 + $0x30] sm:$0xff]
  %v57 = vld [vmem:[#allocation2 + $0x38] sm:$0xff]
  %v58 = vld [vmem:[#allocation2 + $0x40] sm:$0xff]
  %v59 = vld [vmem:[#allocation2 + $0x48] sm:$0xff]
  %v60 = vld [vmem:[#allocation2 + $0x50] sm:$0xff]
  %v61 = vld [vmem:[#allocation2 + $0x58] sm:$0xff]
  %v62 = vld [vmem:[#allocation2 + $0x60] sm:$0xff]
  %v63 = vld [vmem:[#allocation2 + $0x68] sm:$0xff]
  %v64 = vld [vmem:[#allocation2 + $0x70] sm:$0xff]
  %v65 = vld [vmem:[#allocation2 + $0x78] sm:$0xff]
  %v66 = vld [vmem:[%s0] sm:$0xf]
  %v67 = vld [vmem:[%s0 + $0x4] sm:$0xf]
  %v68 = vld [vmem:[%s0 + $0x8] sm:$0xf]
  %v69 = vld [vmem:[%s0 + $0xc] sm:$0xf]
  %v70 = vld [vmem:[%s0 + $0x10] sm:$0xf]
  %v71 = vld [vmem:[%s0 + $0x14] sm:$0xf]
  %v72 = vld [vmem:[%s0 + $0x18] sm:$0xf]
  %v73 = vld [vmem:[%s0 + $0x1c] sm:$0xf]
  %v74 = vld [vmem:[%s0 + $0x20] sm:$0xf]
  %v75 = vld [vmem:[%s0 + $0x24] sm:$0xf]
  %v76 = vld [vmem:[%s0 + $0x28] sm:$0xf]
  %v77 = vld [vmem:[%s0 + $0x2c] sm:$0xf]
  %v78 = vld [vmem:[%s0 + $0x30] sm:$0xf]
  %v79 = vld [vmem:[%s0 + $0x34] sm:$0xf]
  %v80 = vld [vmem:[%s0 + $0x38] sm:$0xf]
  %v81 = vld [vmem:[%s0 + $0x3c] sm:$0xf]
  %v82 = vld [vmem:[%s1] sm:$0xf]
  %v83 = vld [vmem:[%s1 + $0x4] sm:$0xf]
  %v84 = vld [vmem:[%s1 + $0x8] sm:$0xf]
  %v85 = vld [vmem:[%s1 + $0xc] sm:$0xf]
  %v86 = vld [vmem:[%s1 + $0x10] sm:$0xf]
  %v87 = vld [vmem:[%s1 + $0x14] sm:$0xf]
  %v88 = vld [vmem:[%s1 + $0x18] sm:$0xf]
  %v89 = vld [vmem:[%s1 + $0x1c] sm:$0xf]
  %v90 = vld [vmem:[%s1 + $0x20] sm:$0xf]
  %v91 = vld [vmem:[%s1 + $0x24] sm:$0xf]
  %v92 = vld [vmem:[%s1 + $0x28] sm:$0xf]
  %v93 = vld [vmem:[%s1 + $0x2c] sm:$0xf]
  %v94 = vld [vmem:[%s1 + $0x30] sm:$0xf]
  %v95 = vld [vmem:[%s1 + $0x34] sm:$0xf]
  %v96 = vld [vmem:[%s1 + $0x38] sm:$0xf]
  %v97 = vld [vmem:[%s1 + $0x3c] sm:$0xf]
  %v114 = vunpack.c.l.b16 %v66
  %v115 = vunpack.c.l.b16 %v67
  %v116 = vunpack.c.l.b16 %v68
  %v117 = vunpack.c.l.b16 %v69
  %v118 = vunpack.c.l.b16 %v70
  %v119 = vunpack.c.l.b16 %v71
  %v120 = vunpack.c.l.b16 %v72
  %v121 = vunpack.c.l.b16 %v73
  %v122 = vunpack.c.l.b16 %v74
  %v123 = vunpack.c.l.b16 %v75
  %v124 = vunpack.c.l.b16 %v76
  %v125 = vunpack.c.l.b16 %v77
  %v126 = vunpack.c.l.b16 %v78
  %v127 = vunpack.c.l.b16 %v79
  %v128 = vunpack.c.l.b16 %v80
  %v129 = vunpack.c.l.b16 %v81
  %v130 = vpack.c.b16 %v115, %v114
  %v131 = vpack.c.b16 %v117, %v116
  %v132 = vpack.c.b16 %v119, %v118
  %v133 = vpack.c.b16 %v121, %v120
  %v134 = vpack.c.b16 %v123, %v122
  %v135 = vpack.c.b16 %v125, %v124
  %v136 = vpack.c.b16 %v127, %v126
  %v137 = vpack.c.b16 %v129, %v128
  %v162 = vunpack.c.l.b16 %v82
  %v163 = vunpack.c.l.b16 %v83
  %v164 = vunpack.c.l.b16 %v84
  %v165 = vunpack.c.l.b16 %v85
  %v166 = vunpack.c.l.b16 %v86
  %v167 = vunpack.c.l.b16 %v87
  %v168 = vunpack.c.l.b16 %v88
  %v169 = vunpack.c.l.b16 %v89
  %v170 = vunpack.c.l.b16 %v90
  %v171 = vunpack.c.l.b16 %v91
  %v172 = vunpack.c.l.b16 %v92
  %v173 = vunpack.c.l.b16 %v93
  %v174 = vunpack.c.l.b16 %v94
  %v175 = vunpack.c.l.b16 %v95
  %v176 = vunpack.c.l.b16 %v96
  %v177 = vunpack.c.l.b16 %v97
  %v178 = vpack.c.b16 %v163, %v162
  %v179 = vpack.c.b16 %v165, %v164
  %v180 = vpack.c.b16 %v167, %v166
  %v181 = vpack.c.b16 %v169, %v168
  %v182 = vpack.c.b16 %v171, %v170
  %v183 = vpack.c.b16 %v173, %v172
  %v184 = vpack.c.b16 %v175, %v174
  %v185 = vpack.c.b16 %v177, %v176
  %194 = vmatpush.bf16.msra.mxu0 %v185
  %195 = vmatpush.bf16.msra.mxu0 %v184
  %196 = vmatpush.bf16.msra.mxu0 %v183
  %197 = vmatpush.bf16.msra.mxu0 %v182
  %198 = vmatpush.bf16.msra.mxu0 %v181
  %199 = vmatpush.bf16.msra.mxu0 %v180
  %200 = vmatpush.bf16.msra.mxu0 %v179
  %201 = vmatpush.bf16.msra.mxu0 %v178
  %202 = vmatmul.bf16.gmra.mxu0 %v130
  %v203 = vpop.f32.mrf.mxu0
  %v204 = vadd.f32 0.0, %v203
  %v205 = vpop.f32.mrf.mxu0
  %v206 = vadd.f32 0.0, %v205
  %207 = vmatmul.bf16.gmra.mxu0 %v131
  %v208 = vpop.f32.mrf.mxu0
  %v209 = vadd.f32 0.0, %v208
  %v210 = vpop.f32.mrf.mxu0
  %v211 = vadd.f32 0.0, %v210
  %212 = vmatmul.bf16.gmra.mxu0 %v132
  %v213 = vpop.f32.mrf.mxu0
  %v214 = vadd.f32 0.0, %v213
  %v215 = vpop.f32.mrf.mxu0
  %v216 = vadd.f32 0.0, %v215
  %217 = vmatmul.bf16.gmra.mxu0 %v133
  %v218 = vpop.f32.mrf.mxu0
  %v219 = vadd.f32 0.0, %v218
  %v220 = vpop.f32.mrf.mxu0
  %v221 = vadd.f32 0.0, %v220
  %222 = vmatmul.bf16.gmra.mxu0 %v134
  %v223 = vpop.f32.mrf.mxu0
  %v224 = vadd.f32 0.0, %v223
  %v225 = vpop.f32.mrf.mxu0
  %v226 = vadd.f32 0.0, %v225
  %227 = vmatmul.bf16.gmra.mxu0 %v135
  %v228 = vpop.f32.mrf.mxu0
  %v229 = vadd.f32 0.0, %v228
  %v230 = vpop.f32.mrf.mxu0
  %v231 = vadd.f32 0.0, %v230
  %232 = vmatmul.bf16.gmra.mxu0 %v136
  %v233 = vpop.f32.mrf.mxu0
  %v234 = vadd.f32 0.0, %v233
  %v235 = vpop.f32.mrf.mxu0
  %v236 = vadd.f32 0.0, %v235
  %237 = vmatmul.bf16.gmra.mxu0 %v137
  %v238 = vpop.f32.mrf.mxu0
  %v239 = vadd.f32 0.0, %v238
  %v240 = vpop.f32.mrf.mxu0
  %v241 = vadd.f32 0.0, %v240
  %242 = vdwg.mxu0
  %v243 = vadd.f32 %v50, %v204
  %v244 = vadd.f32 %v51, %v206
  %v245 = vadd.f32 %v52, %v209
  %v246 = vadd.f32 %v53, %v211
  %v247 = vadd.f32 %v54, %v214
  %v248 = vadd.f32 %v55, %v216
  %v249 = vadd.f32 %v56, %v219
  %v250 = vadd.f32 %v57, %v221
  %v251 = vadd.f32 %v58, %v224
  %v252 = vadd.f32 %v59, %v226
  %v253 = vadd.f32 %v60, %v229
  %v254 = vadd.f32 %v61, %v231
  %v255 = vadd.f32 %v62, %v234
  %v256 = vadd.f32 %v63, %v236
  %v257 = vadd.f32 %v64, %v239
  %v258 = vadd.f32 %v65, %v241
  %vm259 = vcmask 261120
  %260 = vst.msk [vmem:[#allocation2] sm:$0xff] %vm259, %v243
  %261 = vst.msk [vmem:[#allocation2 + $0x8] sm:$0xff] %vm259, %v244
  %262 = vst.msk [vmem:[#allocation2 + $0x10] sm:$0xff] %vm259, %v245
  %263 = vst.msk [vmem:[#allocation2 + $0x18] sm:$0xff] %vm259, %v246
  %264 = vst.msk [vmem:[#allocation2 + $0x20] sm:$0xff] %vm259, %v247
  %265 = vst.msk [vmem:[#allocation2 + $0x28] sm:$0xff] %vm259, %v248
  %266 = vst.msk [vmem:[#allocation2 + $0x30] sm:$0xff] %vm259, %v249
  %267 = vst.msk [vmem:[#allocation2 + $0x38] sm:$0xff] %vm259, %v250
  %268 = vst.msk [vmem:[#allocation2 + $0x40] sm:$0xff] %vm259, %v251
  %269 = vst.msk [vmem:[#allocation2 + $0x48] sm:$0xff] %vm259, %v252
  %270 = vst.msk [vmem:[#allocation2 + $0x50] sm:$0xff] %vm259, %v253
  %271 = vst.msk [vmem:[#allocation2 + $0x58] sm:$0xff] %vm259, %v254
  %272 = vst.msk [vmem:[#allocation2 + $0x60] sm:$0xff] %vm259, %v255
  %273 = vst.msk [vmem:[#allocation2 + $0x68] sm:$0xff] %vm259, %v256
  %274 = vst.msk [vmem:[#allocation2 + $0x70] sm:$0xff] %vm259, %v257
  %275 = vst.msk [vmem:[#allocation2 + $0x78] sm:$0xff] %vm259, %v258
  // Predicated region
  $region38: #{sage_extract.3} parent=0 // pred_check
    %p276 = pneg %p29
  $region39: #{sage_extract.3} parent=0 // pred_check_branch
    %278 = sbr.rel (%p276) target = $region41
  $region40: #{sage_extract.3} parent=0 // pred_region
    %v279 = vld [vmem:[%s2] sm:$0xf]
    %v280 = vld [vmem:[%s2 + $0x4] sm:$0xf]
    %v281 = vld [vmem:[%s2 + $0x8] sm:$0xf]
    %v282 = vld [vmem:[%s2 + $0xc] sm:$0xf]
    %v283 = vld [vmem:[%s2 + $0x10] sm:$0xf]
    %v284 = vld [vmem:[%s2 + $0x14] sm:$0xf]
    %v285 = vld [vmem:[%s2 + $0x18] sm:$0xf]
    %v286 = vld [vmem:[%s2 + $0x1c] sm:$0xf]
    %v287 = vld [vmem:[%s2 + $0x20] sm:$0xf]
    %v288 = vld [vmem:[%s2 + $0x24] sm:$0xf]
    %v289 = vld [vmem:[%s2 + $0x28] sm:$0xf]
    %v290 = vld [vmem:[%s2 + $0x2c] sm:$0xf]
    %v291 = vld [vmem:[%s2 + $0x30] sm:$0xf]
    %v292 = vld [vmem:[%s2 + $0x34] sm:$0xf]
    %v293 = vld [vmem:[%s2 + $0x38] sm:$0xf]
    %v294 = vld [vmem:[%s2 + $0x3c] sm:$0xf]
    %v295 = vld [vmem:[%s4] sm:$0xf]
    %v296 = vld [vmem:[%s4 + $0x4] sm:$0xf]
    %v297 = vld [vmem:[%s4 + $0x8] sm:$0xf]
    %v298 = vld [vmem:[%s4 + $0xc] sm:$0xf]
    %v299 = vld [vmem:[%s4 + $0x10] sm:$0xf]
    %v300 = vld [vmem:[%s4 + $0x14] sm:$0xf]
    %v301 = vld [vmem:[%s4 + $0x18] sm:$0xf]
    %v302 = vld [vmem:[%s4 + $0x1c] sm:$0xf]
    %v303 = vld [vmem:[%s4 + $0x20] sm:$0xf]
    %v304 = vld [vmem:[%s4 + $0x24] sm:$0xf]
    %v305 = vld [vmem:[%s4 + $0x28] sm:$0xf]
    %v306 = vld [vmem:[%s4 + $0x2c] sm:$0xf]
    %v307 = vld [vmem:[%s4 + $0x30] sm:$0xf]
    %v308 = vld [vmem:[%s4 + $0x34] sm:$0xf]
    %v309 = vld [vmem:[%s4 + $0x38] sm:$0xf]
    %v310 = vld [vmem:[%s4 + $0x3c] sm:$0xf]
    %v327 = vunpack.c.l.b16 %v279
    %v328 = vunpack.c.l.b16 %v280
    %v329 = vunpack.c.l.b16 %v281
    %v330 = vunpack.c.l.b16 %v282
    %v331 = vunpack.c.l.b16 %v283
    %v332 = vunpack.c.l.b16 %v284
    %v333 = vunpack.c.l.b16 %v285
    %v334 = vunpack.c.l.b16 %v286
    %v335 = vunpack.c.l.b16 %v287
    %v336 = vunpack.c.l.b16 %v288
    %v337 = vunpack.c.l.b16 %v289
    %v338 = vunpack.c.l.b16 %v290
    %v339 = vunpack.c.l.b16 %v291
    %v340 = vunpack.c.l.b16 %v292
    %v341 = vunpack.c.l.b16 %v293
    %v342 = vunpack.c.l.b16 %v294
    %v343 = vpack.c.b16 %v328, %v327
    %v344 = vpack.c.b16 %v330, %v329
    %v345 = vpack.c.b16 %v332, %v331
    %v346 = vpack.c.b16 %v334, %v333
    %v347 = vpack.c.b16 %v336, %v335
    %v348 = vpack.c.b16 %v338, %v337
    %v349 = vpack.c.b16 %v340, %v339
    %v350 = vpack.c.b16 %v342, %v341
    %v375 = vunpack.c.l.b16 %v295
    %v376 = vunpack.c.l.b16 %v296
    %v377 = vunpack.c.l.b16 %v297
    %v378 = vunpack.c.l.b16 %v298
    %v379 = vunpack.c.l.b16 %v299
    %v380 = vunpack.c.l.b16 %v300
    %v381 = vunpack.c.l.b16 %v301
    %v382 = vunpack.c.l.b16 %v302
    %v383 = vunpack.c.l.b16 %v303
    %v384 = vunpack.c.l.b16 %v304
    %v385 = vunpack.c.l.b16 %v305
    %v386 = vunpack.c.l.b16 %v306
    %v387 = vunpack.c.l.b16 %v307
    %v388 = vunpack.c.l.b16 %v308
    %v389 = vunpack.c.l.b16 %v309
    %v390 = vunpack.c.l.b16 %v310
    %v391 = vpack.c.b16 %v376, %v375
    %v392 = vpack.c.b16 %v378, %v377
    %v393 = vpack.c.b16 %v380, %v379
    %v394 = vpack.c.b16 %v382, %v381
    %v395 = vpack.c.b16 %v384, %v383
    %v396 = vpack.c.b16 %v386, %v385
    %v397 = vpack.c.b16 %v388, %v387
    %v398 = vpack.c.b16 %v390, %v389
    %407 = vmatpush.bf16.msra.mxu0 %v398
    %408 = vmatpush.bf16.msra.mxu0 %v397
    %409 = vmatpush.bf16.msra.mxu0 %v396
    %410 = vmatpush.bf16.msra.mxu0 %v395
    %411 = vmatpush.bf16.msra.mxu0 %v394
    %412 = vmatpush.bf16.msra.mxu0 %v393
    %413 = vmatpush.bf16.msra.mxu0 %v392
    %414 = vmatpush.bf16.msra.mxu0 %v391
    %415 = vmatmul.bf16.gmra.mxu0 %v343
    %v416 = vpop.f32.mrf.mxu0
    %v417 = vadd.f32 0.0, %v416
    %v418 = vpop.f32.mrf.mxu0
    %v419 = vadd.f32 0.0, %v418
    %420 = vmatmul.bf16.gmra.mxu0 %v344
    %v421 = vpop.f32.mrf.mxu0
    %v422 = vadd.f32 0.0, %v421
    %v423 = vpop.f32.mrf.mxu0
    %v424 = vadd.f32 0.0, %v423
    %425 = vmatmul.bf16.gmra.mxu0 %v345
    %v426 = vpop.f32.mrf.mxu0
    %v427 = vadd.f32 0.0, %v426
    %v428 = vpop.f32.mrf.mxu0
    %v429 = vadd.f32 0.0, %v428
    %430 = vmatmul.bf16.gmra.mxu0 %v346
    %v431 = vpop.f32.mrf.mxu0
    %v432 = vadd.f32 0.0, %v431
    %v433 = vpop.f32.mrf.mxu0
    %v434 = vadd.f32 0.0, %v433
    %435 = vmatmul.bf16.gmra.mxu0 %v347
    %v436 = vpop.f32.mrf.mxu0
    %v437 = vadd.f32 0.0, %v436
    %v438 = vpop.f32.mrf.mxu0
    %v439 = vadd.f32 0.0, %v438
    %440 = vmatmul.bf16.gmra.mxu0 %v348
    %v441 = vpop.f32.mrf.mxu0
    %v442 = vadd.f32 0.0, %v441
    %v443 = vpop.f32.mrf.mxu0
    %v444 = vadd.f32 0.0, %v443
    %445 = vmatmul.bf16.gmra.mxu0 %v349
    %v446 = vpop.f32.mrf.mxu0
    %v447 = vadd.f32 0.0, %v446
    %v448 = vpop.f32.mrf.mxu0
    %v449 = vadd.f32 0.0, %v448
    %450 = vmatmul.bf16.gmra.mxu0 %v350
    %v451 = vpop.f32.mrf.mxu0
    %v452 = vadd.f32 0.0, %v451
    %v453 = vpop.f32.mrf.mxu0
    %v454 = vadd.f32 0.0, %v453
    %455 = vdwg.mxu0
    %v456 = vld [vmem:[#allocation2] sm:$0xff]
    %v457 = vld [vmem:[#allocation2 + $0x8] sm:$0xff]
    %v458 = vld [vmem:[#allocation2 + $0x10] sm:$0xff]
    %v459 = vld [vmem:[#allocation2 + $0x18] sm:$0xff]
    %v460 = vld [vmem:[#allocation2 + $0x20] sm:$0xff]
    %v461 = vld [vmem:[#allocation2 + $0x28] sm:$0xff]
    %v462 = vld [vmem:[#allocation2 + $0x30] sm:$0xff]
    %v463 = vld [vmem:[#allocation2 + $0x38] sm:$0xff]
    %v464 = vld [vmem:[#allocation2 + $0x40] sm:$0xff]
    %v465 = vld [vmem:[#allocation2 + $0x48] sm:$0xff]
    %v466 = vld [vmem:[#allocation2 + $0x50] sm:$0xff]
    %v467 = vld [vmem:[#allocation2 + $0x58] sm:$0xff]
    %v468 = vld [vmem:[#allocation2 + $0x60] sm:$0xff]
    %v469 = vld [vmem:[#allocation2 + $0x68] sm:$0xff]
    %v470 = vld [vmem:[#allocation2 + $0x70] sm:$0xff]
    %v471 = vld [vmem:[#allocation2 + $0x78] sm:$0xff]
    %v472 = vld [vmem:[%s3] sm:$0xff]
    %v473 = vld [vmem:[%s3 + $0x8] sm:$0xff]
    %v474 = vld [vmem:[%s3 + $0x10] sm:$0xff]
    %v475 = vld [vmem:[%s3 + $0x18] sm:$0xff]
    %v476 = vld [vmem:[%s3 + $0x20] sm:$0xff]
    %v477 = vld [vmem:[%s3 + $0x28] sm:$0xff]
    %v478 = vld [vmem:[%s3 + $0x30] sm:$0xff]
    %v479 = vld [vmem:[%s3 + $0x38] sm:$0xff]
    %v480 = vld [vmem:[%s3 + $0x40] sm:$0xff]
    %v481 = vld [vmem:[%s3 + $0x48] sm:$0xff]
    %v482 = vld [vmem:[%s3 + $0x50] sm:$0xff]
    %v483 = vld [vmem:[%s3 + $0x58] sm:$0xff]
    %v484 = vld [vmem:[%s3 + $0x60] sm:$0xff]
    %v485 = vld [vmem:[%s3 + $0x68] sm:$0xff]
    %v486 = vld [vmem:[%s3 + $0x70] sm:$0xff]
    %v487 = vld [vmem:[%s3 + $0x78] sm:$0xff]
    %489 = vset.pattern.permute.xlu0 0
    %490 = vperm.xlu0 %489, %v472
    %v491 = vpop.permute.xlu0 %490
    %494 = vset.pattern.permute.xlu0 0
    %495 = vperm.xlu0 %494, %v473
    %v496 = vpop.permute.xlu0 %495
    %499 = vset.pattern.permute.xlu0 0
    %500 = vperm.xlu0 %499, %v474
    %v501 = vpop.permute.xlu0 %500
    %504 = vset.pattern.permute.xlu0 0
    %505 = vperm.xlu0 %504, %v475
    %v506 = vpop.permute.xlu0 %505
    %509 = vset.pattern.permute.xlu0 0
    %510 = vperm.xlu0 %509, %v476
    %v511 = vpop.permute.xlu0 %510
    %514 = vset.pattern.permute.xlu0 0
    %515 = vperm.xlu0 %514, %v477
    %v516 = vpop.permute.xlu0 %515
    %519 = vset.pattern.permute.xlu0 0
    %520 = vperm.xlu0 %519, %v478
    %v521 = vpop.permute.xlu0 %520
    %524 = vset.pattern.permute.xlu0 0
    %525 = vperm.xlu0 %524, %v479
    %v526 = vpop.permute.xlu0 %525
    %529 = vset.pattern.permute.xlu0 0
    %530 = vperm.xlu0 %529, %v480
    %v531 = vpop.permute.xlu0 %530
    %534 = vset.pattern.permute.xlu0 0
    %535 = vperm.xlu0 %534, %v481
    %v536 = vpop.permute.xlu0 %535
    %539 = vset.pattern.permute.xlu0 0
    %540 = vperm.xlu0 %539, %v482
    %v541 = vpop.permute.xlu0 %540
    %544 = vset.pattern.permute.xlu0 0
    %545 = vperm.xlu0 %544, %v483
    %v546 = vpop.permute.xlu0 %545
    %549 = vset.pattern.permute.xlu0 0
    %550 = vperm.xlu0 %549, %v484
    %v551 = vpop.permute.xlu0 %550
    %554 = vset.pattern.permute.xlu0 0
    %555 = vperm.xlu0 %554, %v485
    %v556 = vpop.permute.xlu0 %555
    %559 = vset.pattern.permute.xlu0 0
    %560 = vperm.xlu0 %559, %v486
    %v561 = vpop.permute.xlu0 %560
    %564 = vset.pattern.permute.xlu0 0
    %565 = vperm.xlu0 %564, %v487
    %v566 = vpop.permute.xlu0 %565
    %v568 = vmul.f32 %v456, %v491
    %v569 = vmul.f32 %v457, %v496
    %v570 = vmul.f32 %v458, %v501
    %v571 = vmul.f32 %v459, %v506
    %v572 = vmul.f32 %v460, %v511
    %v573 = vmul.f32 %v461, %v516
    %v574 = vmul.f32 %v462, %v521
    %v575 = vmul.f32 %v463, %v526
    %v576 = vmul.f32 %v464, %v531
    %v577 = vmul.f32 %v465, %v536
    %v578 = vmul.f32 %v466, %v541
    %v579 = vmul.f32 %v467, %v546
    %v580 = vmul.f32 %v468, %v551
    %v581 = vmul.f32 %v469, %v556
    %v582 = vmul.f32 %v470, %v561
    %v583 = vmul.f32 %v471, %v566
    %v584 = vld [vmem:[%s5] sm:$0x1]
    %v586 = vperm.slane %v584, 0
    %v588 = vadd.f32 %v568, %v586
    %v589 = vadd.f32 %v569, %v586
    %v590 = vadd.f32 %v570, %v586
    %v591 = vadd.f32 %v571, %v586
    %v592 = vadd.f32 %v572, %v586
    %v593 = vadd.f32 %v573, %v586
    %v594 = vadd.f32 %v574, %v586
    %v595 = vadd.f32 %v575, %v586
    %v596 = vadd.f32 %v576, %v586
    %v597 = vadd.f32 %v577, %v586
    %v598 = vadd.f32 %v578, %v586
    %v599 = vadd.f32 %v579, %v586
    %v600 = vadd.f32 %v580, %v586
    %v601 = vadd.f32 %v581, %v586
    %v602 = vadd.f32 %v582, %v586
    %v603 = vadd.f32 %v583, %v586
    %v604 = vadd.f32 %v588, %v417
    %v605 = vadd.f32 %v589, %v419
    %v606 = vadd.f32 %v590, %v422
    %v607 = vadd.f32 %v591, %v424
    %v608 = vadd.f32 %v592, %v427
    %v609 = vadd.f32 %v593, %v429
    %v610 = vadd.f32 %v594, %v432
    %v611 = vadd.f32 %v595, %v434
    %v612 = vadd.f32 %v596, %v437
    %v613 = vadd.f32 %v597, %v439
    %v614 = vadd.f32 %v598, %v442
    %v615 = vadd.f32 %v599, %v444
    %v616 = vadd.f32 %v600, %v447
    %v617 = vadd.f32 %v601, %v449
    %v618 = vadd.f32 %v602, %v452
    %v619 = vadd.f32 %v603, %v454
    %v620 = vmax.f32 %v604, 0.0
    %v621 = vmax.f32 %v605, 0.0
    %v622 = vmax.f32 %v606, 0.0
    %v623 = vmax.f32 %v607, 0.0
    %v624 = vmax.f32 %v608, 0.0
    %v625 = vmax.f32 %v609, 0.0
    %v626 = vmax.f32 %v610, 0.0
    %v627 = vmax.f32 %v611, 0.0
    %v628 = vmax.f32 %v612, 0.0
    %v629 = vmax.f32 %v613, 0.0
    %v630 = vmax.f32 %v614, 0.0
    %v631 = vmax.f32 %v615, 0.0
    %v632 = vmax.f32 %v616, 0.0
    %v633 = vmax.f32 %v617, 0.0
    %v634 = vmax.f32 %v618, 0.0
    %v635 = vmax.f32 %v619, 0.0
    %v636 = vld [vmem:[%s6] sm:$0xff]
    %v637 = vld [vmem:[%s6 + $0x8] sm:$0xff]
    %v638 = vld [vmem:[%s6 + $0x10] sm:$0xff]
    %v639 = vld [vmem:[%s6 + $0x18] sm:$0xff]
    %v640 = vld [vmem:[%s7] sm:$0x1]
    %v642 = vperm.slane %v640, 0
    %v645 = vsel %vm259, %v620, 0
    %v648 = vsel %vm259, %v621, 0
    %v651 = vsel %vm259, %v622, 0
    %v654 = vsel %vm259, %v623, 0
    %v657 = vsel %vm259, %v624, 0
    %v660 = vsel %vm259, %v625, 0
    %v663 = vsel %vm259, %v626, 0
    %v666 = vsel %vm259, %v627, 0
    %v669 = vsel %vm259, %v628, 0
    %v672 = vsel %vm259, %v629, 0
    %v675 = vsel %vm259, %v630, 0
    %v678 = vsel %vm259, %v631, 0
    %v681 = vsel %vm259, %v632, 0
    %v684 = vsel %vm259, %v633, 0
    %v687 = vsel %vm259, %v634, 0
    %v690 = vsel %vm259, %v635, 0
    %692 = vmatpush.msra.mxu0 0.0
    %693 = vmatpush.msra.mxu0 0.0
    %694 = vmatpush.msra.mxu0 0.0
    %695 = vmatpush.msra.mxu0 0.0
    %696 = vmatpush.msra.mxu0 0.0
    %697 = vmatpush.msra.mxu0 0.0
    %698 = vmatpush.msra.mxu0 0.0
    %699 = vmatpush.msra.mxu0 0.0
    %700 = vmatpush.msra.mxu0 0.0
    %701 = vmatpush.msra.mxu0 0.0
    %702 = vmatpush.msra.mxu0 0.0
    %703 = vmatpush.msra.mxu0 0.0
    %704 = vmatpush.msra.mxu0 %v639
    %705 = vmatpush.msra.mxu0 %v638
    %706 = vmatpush.msra.mxu0 %v637
    %707 = vmatpush.msra.mxu0 %v636
    %708 = vmatmul.f32.gmra.mxu0 %v645
    %v709 = vpop.f32.mrf.mxu0
    %v710 = vadd.f32 %v642, %v709
    %711 = vmatmul.f32.gmra.mxu0 %v648
    %v712 = vpop.f32.mrf.mxu0
    %v713 = vadd.f32 %v642, %v712
    %714 = vmatmul.f32.gmra.mxu0 %v651
    %v715 = vpop.f32.mrf.mxu0
    %v716 = vadd.f32 %v642, %v715
    %717 = vmatmul.f32.gmra.mxu0 %v654
    %v718 = vpop.f32.mrf.mxu0
    %v719 = vadd.f32 %v642, %v718
    %720 = vmatmul.f32.gmra.mxu0 %v657
    %v721 = vpop.f32.mrf.mxu0
    %v722 = vadd.f32 %v642, %v721
    %723 = vmatmul.f32.gmra.mxu0 %v660
    %v724 = vpop.f32.mrf.mxu0
    %v725 = vadd.f32 %v642, %v724
    %726 = vmatmul.f32.gmra.mxu0 %v663
    %v727 = vpop.f32.mrf.mxu0
    %v728 = vadd.f32 %v642, %v727
    %729 = vmatmul.f32.gmra.mxu0 %v666
    %v730 = vpop.f32.mrf.mxu0
    %v731 = vadd.f32 %v642, %v730
    %732 = vmatmul.f32.gmra.mxu0 %v669
    %v733 = vpop.f32.mrf.mxu0
    %v734 = vadd.f32 %v642, %v733
    %735 = vmatmul.f32.gmra.mxu0 %v672
    %v736 = vpop.f32.mrf.mxu0
    %v737 = vadd.f32 %v642, %v736
    %738 = vmatmul.f32.gmra.mxu0 %v675
    %v739 = vpop.f32.mrf.mxu0
    %v740 = vadd.f32 %v642, %v739
    %741 = vmatmul.f32.gmra.mxu0 %v678
    %v742 = vpop.f32.mrf.mxu0
    %v743 = vadd.f32 %v642, %v742
    %744 = vmatmul.f32.gmra.mxu0 %v681
    %v745 = vpop.f32.mrf.mxu0
    %v746 = vadd.f32 %v642, %v745
    %747 = vmatmul.f32.gmra.mxu0 %v684
    %v748 = vpop.f32.mrf.mxu0
    %v749 = vadd.f32 %v642, %v748
    %750 = vmatmul.f32.gmra.mxu0 %v687
    %v751 = vpop.f32.mrf.mxu0
    %v752 = vadd.f32 %v642, %v751
    %753 = vmatmul.f32.gmra.mxu0 %v690
    %v754 = vpop.f32.mrf.mxu0
    %v755 = vadd.f32 %v642, %v754
    %756 = vdwg.mxu0
    %757 = vst [vmem:[%s8] sm:$0xff] %v710
    %758 = vst [vmem:[%s8 + $0x8] sm:$0xff] %v713
    %759 = vst [vmem:[%s8 + $0x10] sm:$0xff] %v716
    %760 = vst [vmem:[%s8 + $0x18] sm:$0xff] %v719
    %761 = vst [vmem:[%s8 + $0x20] sm:$0xff] %v722
    %762 = vst [vmem:[%s8 + $0x28] sm:$0xff] %v725
    %763 = vst [vmem:[%s8 + $0x30] sm:$0xff] %v728
    %764 = vst [vmem:[%s8 + $0x38] sm:$0xff] %v731
    %765 = vst [vmem:[%s8 + $0x40] sm:$0xff] %v734
    %766 = vst [vmem:[%s8 + $0x48] sm:$0xff] %v737
    %767 = vst [vmem:[%s8 + $0x50] sm:$0xff] %v740
    %768 = vst [vmem:[%s8 + $0x58] sm:$0xff] %v743
    %769 = vst [vmem:[%s8 + $0x60] sm:$0xff] %v746
    %770 = vst [vmem:[%s8 + $0x68] sm:$0xff] %v749
    %771 = vst [vmem:[%s8 + $0x70] sm:$0xff] %v752
    %772 = vst [vmem:[%s8 + $0x78] sm:$0xff] %v755
  $region41: #{sage_extract.3} parent=0 // pred_fallthru
    _
  // Predicated region
  $region42: #{sage_extract.3} parent=0 // pred_check
    _
  $region43: #{sage_extract.3} parent=0 // pred_check_branch
    %774 = sbr.rel (0) target = $region45
  $region44: #{sage_extract.3} parent=0 // pred_region
    _
  $region45: #{sage_extract.3} parent=0 // pred_fallthru
    _
  // Predicated region
  $region46: #{sage_extract.3} parent=0 // pred_check
    _
  $region47: #{sage_extract.3} parent=0 // pred_check_branch
    %776 = sbr.rel (0) target = $region49
  $region48: #{sage_extract.3} parent=0 // pred_region
    _
  $region49: #{sage_extract.3} parent=0 // pred_fallthru
    _

</llo_original>
